<compile_context>
chip_gen: v7x
topology: tpu7x:2x2x1
jax: 0.10.0
libtpu: 0.0.40
codegen_flags: <defaults>
</compile_context>

<pallas_src>
import jax
import jax.numpy as jnp
from jax.experimental import pallas as pl
from jax.experimental.pallas import tpu as pltpu

# ---------------- model hyper-parameters (small, consistent with the module) -------------
N_ATOMS   = 8      # nr_atoms
N_PAIRS   = 16     # nr_pairs
F         = 32     # number_of_per_atom_features / nr_atom_basis
F3        = 3 * F
K_RBF     = 16     # number_of_radial_basis_functions
N_BLOCKS  = 2      # number_of_interaction_modules (shared_interactions=False, shared_filters=False)
PROP_DIM  = 1      # predicted_properties=["per_atom_energy"]
R_CUT     = 0.5    # maximum_interaction_radius (nm)
EPS       = 1e-8
MAX_Z     = 20     # atomic-number embedding table size (FeaturizeInput)


def _silu(x):
    # activation_function = SiLU
    return x / (1.0 + jnp.exp(-x))


def painn_kernel(
    # precomputed pair data (wrapper glue)
    fij_ref,      # (P, K)    gaussian RBF features
    cut_ref,      # (P, 1)    cosine attenuation
    dirt_ref,     # (P, 3F)   unit direction, lane-tiled: [:, c*F+f] = dir[:, c]
    emb_ref,      # (N, F)    per-atom scalar features (atomic-number embedding)
    J_ref,        # (P, N)    one-hot(idx_j) gather matrix
    S_ref,        # (N, P)    one-hot(idx_i)^T scatter-add matrix
    # PaiNNRepresentation filter_net (non-shared): Dense(K, nB*3F), column-chunked per block
    fW_ref,       # (nB, K, 3F)
    fb_ref,       # (nB, 1, 3F)
    # Message.interatomic_net: Dense(F,F)+SiLU, Dense(F,3F)
    mW1_ref,      # (nB, F, F)
    mb1_ref,      # (nB, 1, F)
    mW2_ref,      # (nB, F, 3F)
    mb2_ref,      # (nB, 1, 3F)
    # Update.linear_transformation Dense(F,2F,bias=False) as block-diag on lane-stacked mu
    uLin_ref,     # (nB, 3F, 6F)  -> [v_V_lane | v_U_lane]
    # Update.intra_atomic_net: Dense(2F,F)+SiLU, Dense(F,3F)
    uW1_ref,      # (nB, 2F, F)   rows [0:F] multiply q, rows [F:2F] multiply ||v_V||
    ub1_ref,      # (nB, 1, F)
    uW2_ref,      # (nB, F, 3F)   -> (a_ss | a_vv | a_sv)
    ub2_ref,      # (nB, 1, 3F)
    # output_layers["per_atom_energy"]: Dense(F,F)+SiLU, Dense(F,1)
    oW1_ref,      # (F, F)
    ob1_ref,      # (1, F)
    oW2t_ref,     # (1, F)   Dense(F,1) weight stored as a row (VPU reduction)
    ob2_ref,      # (1, 1)
    # outputs
    scalar_out_ref,   # (N, F)
    vector_out_ref,   # (N, 3F)  lane-stacked cartesian components
    prop_out_ref,     # (N, PROP_DIM)
):
    f32 = jnp.float32
    P = N_PAIRS

    f_ij = fij_ref[...]                                       # (P, K)
    cut3 = jnp.broadcast_to(cut_ref[...], (P, F3))            # hoisted once (not per block)
    dirt = dirt_ref[...]                                      # (P, 3F)
    J = J_ref[...]                                            # (P, N)
    S = S_ref[...]                                            # (N, P)

    q  = emb_ref[...]                                         # (N, F)  scalar features
    mu = jnp.zeros((N_ATOMS, F3), f32)                        # vector features start at zero

    for b in range(N_BLOCKS):
        # filters for this block: (f_ij @ W + b) * cutoff  -> (P, 3F), one matmul
        W = (jnp.dot(f_ij, fW_ref[b], preferred_element_type=f32) + fb_ref[b]) * cut3

        # ----------------------------- Message block --------------------------------
        h = _silu(jnp.dot(q, mW1_ref[b], preferred_element_type=f32) + mb1_ref[b])     # (N, F)
        s = jnp.dot(h, mW2_ref[b], preferred_element_type=f32) + mb2_ref[b]            # (N, 3F)

        # single fused gather of [s | mu] over idx_j
        gath = jnp.dot(J, jnp.concatenate([s, mu], axis=-1),
                       preferred_element_type=f32)                                     # (P, 6F)
        sj = W * gath[:, :F3]                                                          # weighted s_j
        vj = gath[:, F3:]                                                              # v_j (lane-stacked)

        ds1 = sj[:, 0:F]                                                               # (P, F)
        ds2 = jnp.concatenate([sj[:, F:2 * F]] * 3, axis=-1)                           # (P, 3F)
        ds3 = jnp.concatenate([sj[:, 2 * F:3 * F]] * 3, axis=-1)                       # (P, 3F)
        dmu = ds2 * dirt + ds3 * vj                                                    # (P, 3F)

        # single fused scatter-add of [ds1 | dmu] over idx_i (output is 4F = 128 lanes)
        delta = jnp.dot(S, jnp.concatenate([ds1, dmu], axis=-1),
                        preferred_element_type=f32)                                    # (N, 4F)
        q  = q  + delta[:, 0:F]
        mu = mu + delta[:, F:]

        # ------------------------------ Update block --------------------------------
        vVU = jnp.dot(mu, uLin_ref[b], preferred_element_type=f32)                     # (N, 6F)
        vV = vVU[:, :F3]
        vU = vVU[:, F3:]

        sq = vV * vV
        norm = jnp.sqrt(sq[:, 0:F] + sq[:, F:2 * F] + sq[:, 2 * F:3 * F] + EPS)        # (N, F)
        pr = vV * vU
        dotVU = pr[:, 0:F] + pr[:, F:2 * F] + pr[:, 2 * F:3 * F]                       # (N, F)

        ctx = jnp.concatenate([q, norm], axis=-1)                                      # (N, 2F)
        hh = _silu(jnp.dot(ctx, uW1_ref[b], preferred_element_type=f32) + ub1_ref[b])  # (N, F)
        a = jnp.dot(hh, uW2_ref[b], preferred_element_type=f32) + ub2_ref[b]           # (N, 3F)

        a_ss = a[:, 0:F]
        a_vv = jnp.concatenate([a[:, F:2 * F]] * 3, axis=-1)                           # (N, 3F)
        a_sv = a[:, 2 * F:3 * F]

        q  = q + a_ss + a_sv * dotVU
        mu = mu + a_vv * vU

    # ------------------------------ outputs -------------------------------------------
    scalar_out_ref[...] = q
    vector_out_ref[...] = mu                                   # one lane-dense (N, 3F) store

    # output head ("per_atom_energy"): Dense(F,F)+SiLU then Dense(F,1) as a VPU reduction
    ho = _silu(jnp.dot(q, oW1_ref[...], preferred_element_type=f32) + ob1_ref[...])    # (N, F)
    prop_out_ref[...] = (
        jnp.sum(ho * oW2t_ref[...], axis=-1, keepdims=True) + ob2_ref[...]
    )


def init_params(key):
    ks = jax.random.split(key, 18)

    def w(k, shape, scale=0.1):
        return (scale * jax.random.normal(k, shape)).astype(jnp.float32)

    # Update.linear_transformation Dense(F, 2F, bias=False): columns [v_V | v_U].
    # Fused into a block-diagonal (3F, 6F) matrix acting on lane-stacked mu so that
    # mu_lane @ uLinBig = [v_V_lane | v_U_lane] in a single matmul.
    uLinV = w(ks[7], (N_BLOCKS, F, F))
    uLinU = w(ks[8], (N_BLOCKS, F, F))
    uLinBig = jnp.zeros((N_BLOCKS, F3, 2 * F3), jnp.float32)
    for c in range(3):
        uLinBig = uLinBig.at[:, c * F:(c + 1) * F, c * F:(c + 1) * F].set(uLinV)
        uLinBig = uLinBig.at[:, c * F:(c + 1) * F, F3 + c * F:F3 + (c + 1) * F].set(uLinU)

    return {
        # FeaturizeInput: nn.Embedding(MAX_Z, F)
        "emb_table": w(ks[0], (MAX_Z, F), 1.0),
        # filter_net Dense(K, nB*3F) stored as (nB, K, 3F) fused column blocks
        "fW":  w(ks[1], (N_BLOCKS, K_RBF, F3)),
        "fb":  w(ks[2], (N_BLOCKS, 1, F3)),
        # Message nets (weights stored transposed: (in, out))
        "mW1": w(ks[3], (N_BLOCKS, F, F)),
        "mb1": w(ks[4], (N_BLOCKS, 1, F)),
        "mW2": w(ks[5], (N_BLOCKS, F, F3)),
        "mb2": w(ks[6], (N_BLOCKS, 1, F3)),
        # Update nets
        "uLinBig": uLinBig,
        "uW1":  w(ks[9], (N_BLOCKS, 2 * F, F)),
        "ub1":  w(ks[11], (N_BLOCKS, 1, F)),
        "uW2":  w(ks[12], (N_BLOCKS, F, F3)),
        "ub2":  w(ks[13], (N_BLOCKS, 1, F3)),
        # output head
        "oW1":  w(ks[14], (F, F)),
        "ob1":  w(ks[15], (1, F)),
        "oW2t": w(ks[16], (1, F)),     # Dense(F, 1) weight, stored as a row
        "ob2":  w(ks[17], (1, 1)),
    }


def painn_forward(atomic_numbers, positions, pair_indices, params):
    """PaiNNCore.forward: geometry / RBF glue in XLA + one Pallas kernel for the hot path."""
    idx_i, idx_j = pair_indices[0], pair_indices[1]

    # Pairlist geometry: r_ij, d_ij, dir_ij (NaN-safe division)
    r_ij = positions[idx_j] - positions[idx_i]                       # (P, 3)
    d_ij = jnp.sqrt(jnp.sum(r_ij * r_ij, axis=-1, keepdims=True))    # (P, 1)
    dir_ij = r_ij / jnp.where(d_ij > 0.0, d_ij, 1.0)                 # (P, 3)

    # SchNet gaussian RBF + cosine attenuation (computed in XLA; lane-dense kernel inputs)
    centers = jnp.linspace(0.0, R_CUT, K_RBF, dtype=jnp.float32).reshape(1, K_RBF)
    width = R_CUT / (K_RBF - 1)                                      # SchNet-style width = center spacing
    f_ij = jnp.exp(-0.5 * ((d_ij - centers) / width) ** 2)           # (P, K)
    cut = 0.5 * (jnp.cos(jnp.pi * d_ij / R_CUT) + 1.0)
    cut = jnp.where(d_ij < R_CUT, cut, 0.0)                          # (P, 1)

    # direction pre-tiled along lanes so dmu is one VPU expression inside the kernel
    dir_tiled = jnp.repeat(dir_ij, F, axis=1)                        # (P, 3F)

    # FeaturizeInput (embedding lookup) — glue, trivial gather.
    emb = params["emb_table"][atomic_numbers]                        # (N, F)

    # Gather / scatter-add as one-hot matmuls (MXU-friendly at these toy sizes).
    # TODO(synk): at realistic N_ATOMS/N_PAIRS replace with scalar-prefetched pair indices
    # (PrefetchScalarGridSpec) + per-tile masked accumulation to avoid O(P*N) cost.
    J = jax.nn.one_hot(idx_j, N_ATOMS, dtype=jnp.float32)            # (P, N)
    S = jnp.transpose(jax.nn.one_hot(idx_i, N_ATOMS, dtype=jnp.float32))  # (N, P)

    kernel_inputs = (
        f_ij, cut, dir_tiled, emb, J, S,
        params["fW"], params["fb"],
        params["mW1"], params["mb1"], params["mW2"], params["mb2"],
        params["uLinBig"], params["uW1"], params["ub1"],
        params["uW2"], params["ub2"],
        params["oW1"], params["ob1"], params["oW2t"], params["ob2"],
    )

    vmem = pl.BlockSpec(memory_space=pltpu.MemorySpace.VMEM)
    scalar, vec, prop = pl.pallas_call(
        painn_kernel,
        out_shape=(
            jax.ShapeDtypeStruct((N_ATOMS, F), jnp.float32),
            jax.ShapeDtypeStruct((N_ATOMS, F3), jnp.float32),
            jax.ShapeDtypeStruct((N_ATOMS, PROP_DIM), jnp.float32),
        ),
        in_specs=[vmem] * len(kernel_inputs),
        out_specs=(vmem, vmem, vmem),
    )(*kernel_inputs)

    return {
        "per_atom_scalar_representation": scalar,                    # (N, F)
        "per_atom_vector_representation": vec.reshape(N_ATOMS, 3, F),  # (N, 3, F) like torch
        "per_atom_energy": prop,                                     # (N, PROP_DIM)
        "atomic_numbers": atomic_numbers,
        # TODO(synk): atomic_subsystem_indices is a pure passthrough in the torch module;
        # omitted since no subsystem data is constructed for this synthetic run.
    }


if __name__ == "__main__":
    key = jax.random.PRNGKey(0)
    kp, kpos, kz, ki, kj = jax.random.split(key, 5)

    params = init_params(kp)
    positions = (0.3 * jax.random.normal(kpos, (N_ATOMS, 3))).astype(jnp.float32)
    atomic_numbers = jax.random.randint(kz, (N_ATOMS,), 1, MAX_Z)
    idx_i = jax.random.randint(ki, (N_PAIRS,), 0, N_ATOMS)
    offset = jax.random.randint(kj, (N_PAIRS,), 1, N_ATOMS)
    idx_j = (idx_i + offset) % N_ATOMS      # guarantees i != j
    pair_indices = jnp.stack([idx_i, idx_j], axis=0)

    out = jax.jit(painn_forward)(atomic_numbers, positions, pair_indices, params)
    jax.block_until_ready(out)

    assert out["per_atom_scalar_representation"].shape == (N_ATOMS, F)
    assert out["per_atom_vector_representation"].shape == (N_ATOMS, 3, F)
    assert out["per_atom_energy"].shape == (N_ATOMS, PROP_DIM)
    print("KERNEL_OK")
</pallas_src>

<mosaic_0001>
module attributes {stable_mosaic.version = 11 : i64} {
  func.func @painn_kernel(%arg0: memref<16x16xf32, #tpu.memory_space<vmem>>, %arg1: memref<16x1xf32, #tpu.memory_space<vmem>>, %arg2: memref<16x96xf32, #tpu.memory_space<vmem>>, %arg3: memref<8x32xf32, #tpu.memory_space<vmem>>, %arg4: memref<16x8xf32, #tpu.memory_space<vmem>>, %arg5: memref<8x16xf32, #tpu.memory_space<vmem>>, %arg6: memref<2x16x96xf32, #tpu.memory_space<vmem>>, %arg7: memref<2x1x96xf32, #tpu.memory_space<vmem>>, %arg8: memref<2x32x32xf32, #tpu.memory_space<vmem>>, %arg9: memref<2x1x32xf32, #tpu.memory_space<vmem>>, %arg10: memref<2x32x96xf32, #tpu.memory_space<vmem>>, %arg11: memref<2x1x96xf32, #tpu.memory_space<vmem>>, %arg12: memref<2x96x192xf32, #tpu.memory_space<vmem>>, %arg13: memref<2x64x32xf32, #tpu.memory_space<vmem>>, %arg14: memref<2x1x32xf32, #tpu.memory_space<vmem>>, %arg15: memref<2x32x96xf32, #tpu.memory_space<vmem>>, %arg16: memref<2x1x96xf32, #tpu.memory_space<vmem>>, %arg17: memref<32x32xf32, #tpu.memory_space<vmem>>, %arg18: memref<1x32xf32, #tpu.memory_space<vmem>>, %arg19: memref<1x32xf32, #tpu.memory_space<vmem>>, %arg20: memref<1x1xf32, #tpu.memory_space<vmem>>, %arg21: memref<8x32xf32, #tpu.memory_space<vmem>>, %arg22: memref<8x96xf32, #tpu.memory_space<vmem>>, %arg23: memref<8x1xf32, #tpu.memory_space<vmem>>) attributes {dimension_semantics = [], scalar_prefetch = 0 : i64, scratch_operands = 0 : i64, tpu.core_type = #tpu.core_type<tc>} {
    %c0 = arith.constant 0 : index
    %c0_0 = arith.constant 0 : index
    %0 = vector.load %arg0[%c0, %c0_0] : memref<16x16xf32, #tpu.memory_space<vmem>>, vector<16x16xf32>
    %c0_1 = arith.constant 0 : index
    %c0_2 = arith.constant 0 : index
    %1 = vector.load %arg1[%c0_1, %c0_2] : memref<16x1xf32, #tpu.memory_space<vmem>>, vector<16x1xf32>
    %2 = vector.shape_cast %1 : vector<16x1xf32> to vector<16x1xf32>
    %3 = vector.broadcast %2 : vector<16x1xf32> to vector<16x96xf32>
    %c0_3 = arith.constant 0 : index
    %c0_4 = arith.constant 0 : index
    %4 = vector.load %arg2[%c0_3, %c0_4] : memref<16x96xf32, #tpu.memory_space<vmem>>, vector<16x96xf32>
    %c0_5 = arith.constant 0 : index
    %c0_6 = arith.constant 0 : index
    %5 = vector.load %arg4[%c0_5, %c0_6] : memref<16x8xf32, #tpu.memory_space<vmem>>, vector<16x8xf32>
    %c0_7 = arith.constant 0 : index
    %c0_8 = arith.constant 0 : index
    %6 = vector.load %arg5[%c0_7, %c0_8] : memref<8x16xf32, #tpu.memory_space<vmem>>, vector<8x16xf32>
    %c0_9 = arith.constant 0 : index
    %c0_10 = arith.constant 0 : index
    %7 = vector.load %arg3[%c0_9, %c0_10] : memref<8x32xf32, #tpu.memory_space<vmem>>, vector<8x32xf32>
    %cst = arith.constant 0.000000e+00 : f32
    %8 = vector.broadcast %cst : f32 to vector<8x96xf32>
    %c0_11 = arith.constant 0 : index
    %c0_12 = arith.constant 0 : index
    %c0_13 = arith.constant 0 : index
    %9 = vector.load %arg6[%c0_11, %c0_12, %c0_13] : memref<2x16x96xf32, #tpu.memory_space<vmem>>, vector<1x16x96xf32>
    %10 = vector.shape_cast %9 : vector<1x16x96xf32> to vector<16x96xf32>
    %cst_14 = arith.constant dense<0.000000e+00> : vector<16x96xf32>
    %11 = tpu.matmul %0, %10, %cst_14 {dimension_numbers = #tpu.dot_dimension_numbers<[1], [0], [0], [1], [0, 0, 1, 1], [], []>} : vector<16x16xf32>, vector<16x96xf32>, vector<16x96xf32> -> vector<16x96xf32>
    %c0_15 = arith.constant 0 : index
    %c0_16 = arith.constant 0 : index
    %c0_17 = arith.constant 0 : index
    %12 = vector.load %arg7[%c0_15, %c0_16, %c0_17] : memref<2x1x96xf32, #tpu.memory_space<vmem>>, vector<1x1x96xf32>
    %13 = vector.shape_cast %12 : vector<1x1x96xf32> to vector<1x96xf32>
    %14 = vector.broadcast %13 : vector<1x96xf32> to vector<16x96xf32>
    %15 = arith.addf %11, %14 : vector<16x96xf32>
    %16 = arith.mulf %15, %3 : vector<16x96xf32>
    %c0_18 = arith.constant 0 : index
    %c0_19 = arith.constant 0 : index
    %c0_20 = arith.constant 0 : index
    %17 = vector.load %arg8[%c0_18, %c0_19, %c0_20] : memref<2x32x32xf32, #tpu.memory_space<vmem>>, vector<1x32x32xf32>
    %18 = vector.shape_cast %17 : vector<1x32x32xf32> to vector<32x32xf32>
    %cst_21 = arith.constant dense<0.000000e+00> : vector<8x32xf32>
    %19 = tpu.matmul %7, %18, %cst_21 {dimension_numbers = #tpu.dot_dimension_numbers<[1], [0], [0], [1], [0, 0, 1, 1], [], []>} : vector<8x32xf32>, vector<32x32xf32>, vector<8x32xf32> -> vector<8x32xf32>
    %c0_22 = arith.constant 0 : index
    %c0_23 = arith.constant 0 : index
    %c0_24 = arith.constant 0 : index
    %20 = vector.load %arg9[%c0_22, %c0_23, %c0_24] : memref<2x1x32xf32, #tpu.memory_space<vmem>>, vector<1x1x32xf32>
    %21 = vector.shape_cast %20 : vector<1x1x32xf32> to vector<1x32xf32>
    %22 = vector.broadcast %21 : vector<1x32xf32> to vector<8x32xf32>
    %23 = arith.addf %19, %22 : vector<8x32xf32>
    %cst_25 = arith.constant 0.000000e+00 : f32
    %24 = vector.broadcast %cst_25 : f32 to vector<8x32xf32>
    %25 = arith.subf %24, %23 : vector<8x32xf32>
    %26 = math.exp %25 : vector<8x32xf32>
    %cst_26 = arith.constant 1.000000e+00 : f32
    %27 = vector.broadcast %cst_26 : f32 to vector<8x32xf32>
    %28 = arith.addf %27, %26 : vector<8x32xf32>
    %29 = arith.divf %23, %28 : vector<8x32xf32>
    %c0_27 = arith.constant 0 : index
    %c0_28 = arith.constant 0 : index
    %c0_29 = arith.constant 0 : index
    %30 = vector.load %arg10[%c0_27, %c0_28, %c0_29] : memref<2x32x96xf32, #tpu.memory_space<vmem>>, vector<1x32x96xf32>
    %31 = vector.shape_cast %30 : vector<1x32x96xf32> to vector<32x96xf32>
    %cst_30 = arith.constant dense<0.000000e+00> : vector<8x96xf32>
    %32 = tpu.matmul %29, %31, %cst_30 {dimension_numbers = #tpu.dot_dimension_numbers<[1], [0], [0], [1], [0, 0, 1, 1], [], []>} : vector<8x32xf32>, vector<32x96xf32>, vector<8x96xf32> -> vector<8x96xf32>
    %c0_31 = arith.constant 0 : index
    %c0_32 = arith.constant 0 : index
    %c0_33 = arith.constant 0 : index
    %33 = vector.load %arg11[%c0_31, %c0_32, %c0_33] : memref<2x1x96xf32, #tpu.memory_space<vmem>>, vector<1x1x96xf32>
    %34 = vector.shape_cast %33 : vector<1x1x96xf32> to vector<1x96xf32>
    %35 = vector.broadcast %34 : vector<1x96xf32> to vector<8x96xf32>
    %36 = arith.addf %32, %35 : vector<8x96xf32>
    %37 = tpu.concatenate %36, %8 in 1 : vector<8x96xf32>, vector<8x96xf32> -> vector<8x192xf32>
    %cst_34 = arith.constant dense<0.000000e+00> : vector<16x192xf32>
    %38 = tpu.matmul %5, %37, %cst_34 {dimension_numbers = #tpu.dot_dimension_numbers<[1], [0], [0], [1], [0, 0, 1, 1], [], []>} : vector<16x8xf32>, vector<8x192xf32>, vector<16x192xf32> -> vector<16x192xf32>
    %39 = vector.extract_strided_slice %38 {offsets = [0, 0], sizes = [16, 96], strides = [1, 1]} : vector<16x192xf32> to vector<16x96xf32>
    %40 = arith.mulf %16, %39 : vector<16x96xf32>
    %41 = vector.extract_strided_slice %38 {offsets = [0, 96], sizes = [16, 96], strides = [1, 1]} : vector<16x192xf32> to vector<16x96xf32>
    %42 = vector.extract_strided_slice %40 {offsets = [0, 0], sizes = [16, 32], strides = [1, 1]} : vector<16x96xf32> to vector<16x32xf32>
    %43 = vector.extract_strided_slice %40 {offsets = [0, 32], sizes = [16, 32], strides = [1, 1]} : vector<16x96xf32> to vector<16x32xf32>
    %44 = tpu.concatenate %43, %43, %43 in 1 : vector<16x32xf32>, vector<16x32xf32>, vector<16x32xf32> -> vector<16x96xf32>
    %45 = vector.extract_strided_slice %40 {offsets = [0, 64], sizes = [16, 32], strides = [1, 1]} : vector<16x96xf32> to vector<16x32xf32>
    %46 = tpu.concatenate %45, %45, %45 in 1 : vector<16x32xf32>, vector<16x32xf32>, vector<16x32xf32> -> vector<16x96xf32>
    %47 = arith.mulf %44, %4 : vector<16x96xf32>
    %48 = arith.mulf %46, %41 : vector<16x96xf32>
    %49 = arith.addf %47, %48 : vector<16x96xf32>
    %50 = tpu.concatenate %42, %49 in 1 : vector<16x32xf32>, vector<16x96xf32> -> vector<16x128xf32>
    %cst_35 = arith.constant dense<0.000000e+00> : vector<8x128xf32>
    %51 = tpu.matmul %6, %50, %cst_35 {dimension_numbers = #tpu.dot_dimension_numbers<[1], [0], [0], [1], [0, 0, 1, 1], [], []>} : vector<8x16xf32>, vector<16x128xf32>, vector<8x128xf32> -> vector<8x128xf32>
    %52 = vector.extract_strided_slice %51 {offsets = [0, 0], sizes = [8, 32], strides = [1, 1]} : vector<8x128xf32> to vector<8x32xf32>
    %53 = arith.addf %7, %52 : vector<8x32xf32>
    %54 = vector.extract_strided_slice %51 {offsets = [0, 32], sizes = [8, 96], strides = [1, 1]} : vector<8x128xf32> to vector<8x96xf32>
    %55 = arith.addf %8, %54 : vector<8x96xf32>
    %c0_36 = arith.constant 0 : index
    %c0_37 = arith.constant 0 : index
    %c0_38 = arith.constant 0 : index
    %56 = vector.load %arg12[%c0_36, %c0_37, %c0_38] : memref<2x96x192xf32, #tpu.memory_space<vmem>>, vector<1x96x192xf32>
    %57 = vector.shape_cast %56 : vector<1x96x192xf32> to vector<96x192xf32>
    %cst_39 = arith.constant dense<0.000000e+00> : vector<8x192xf32>
    %58 = tpu.matmul %55, %57, %cst_39 {dimension_numbers = #tpu.dot_dimension_numbers<[1], [0], [0], [1], [0, 0, 1, 1], [], []>} : vector<8x96xf32>, vector<96x192xf32>, vector<8x192xf32> -> vector<8x192xf32>
    %59 = vector.extract_strided_slice %58 {offsets = [0, 0], sizes = [8, 96], strides = [1, 1]} : vector<8x192xf32> to vector<8x96xf32>
    %60 = vector.extract_strided_slice %58 {offsets = [0, 96], sizes = [8, 96], strides = [1, 1]} : vector<8x192xf32> to vector<8x96xf32>
    %61 = arith.mulf %59, %59 : vector<8x96xf32>
    %62 = vector.extract_strided_slice %61 {offsets = [0, 0], sizes = [8, 32], strides = [1, 1]} : vector<8x96xf32> to vector<8x32xf32>
    %63 = vector.extract_strided_slice %61 {offsets = [0, 32], sizes = [8, 32], strides = [1, 1]} : vector<8x96xf32> to vector<8x32xf32>
    %64 = arith.addf %62, %63 : vector<8x32xf32>
    %65 = vector.extract_strided_slice %61 {offsets = [0, 64], sizes = [8, 32], strides = [1, 1]} : vector<8x96xf32> to vector<8x32xf32>
    %66 = arith.addf %64, %65 : vector<8x32xf32>
    %cst_40 = arith.constant 9.99999993E-9 : f32
    %67 = vector.broadcast %cst_40 : f32 to vector<8x32xf32>
    %68 = arith.addf %66, %67 : vector<8x32xf32>
    %69 = math.sqrt %68 : vector<8x32xf32>
    %70 = arith.mulf %59, %60 : vector<8x96xf32>
    %71 = vector.extract_strided_slice %70 {offsets = [0, 0], sizes = [8, 32], strides = [1, 1]} : vector<8x96xf32> to vector<8x32xf32>
    %72 = vector.extract_strided_slice %70 {offsets = [0, 32], sizes = [8, 32], strides = [1, 1]} : vector<8x96xf32> to vector<8x32xf32>
    %73 = arith.addf %71, %72 : vector<8x32xf32>
    %74 = vector.extract_strided_slice %70 {offsets = [0, 64], sizes = [8, 32], strides = [1, 1]} : vector<8x96xf32> to vector<8x32xf32>
    %75 = arith.addf %73, %74 : vector<8x32xf32>
    %76 = tpu.concatenate %53, %69 in 1 : vector<8x32xf32>, vector<8x32xf32> -> vector<8x64xf32>
    %c0_41 = arith.constant 0 : index
    %c0_42 = arith.constant 0 : index
    %c0_43 = arith.constant 0 : index
    %77 = vector.load %arg13[%c0_41, %c0_42, %c0_43] : memref<2x64x32xf32, #tpu.memory_space<vmem>>, vector<1x64x32xf32>
    %78 = vector.shape_cast %77 : vector<1x64x32xf32> to vector<64x32xf32>
    %cst_44 = arith.constant dense<0.000000e+00> : vector<8x32xf32>
    %79 = tpu.matmul %76, %78, %cst_44 {dimension_numbers = #tpu.dot_dimension_numbers<[1], [0], [0], [1], [0, 0, 1, 1], [], []>} : vector<8x64xf32>, vector<64x32xf32>, vector<8x32xf32> -> vector<8x32xf32>
    %c0_45 = arith.constant 0 : index
    %c0_46 = arith.constant 0 : index
    %c0_47 = arith.constant 0 : index
    %80 = vector.load %arg14[%c0_45, %c0_46, %c0_47] : memref<2x1x32xf32, #tpu.memory_space<vmem>>, vector<1x1x32xf32>
    %81 = vector.shape_cast %80 : vector<1x1x32xf32> to vector<1x32xf32>
    %82 = vector.broadcast %81 : vector<1x32xf32> to vector<8x32xf32>
    %83 = arith.addf %79, %82 : vector<8x32xf32>
    %cst_48 = arith.constant 0.000000e+00 : f32
    %84 = vector.broadcast %cst_48 : f32 to vector<8x32xf32>
    %85 = arith.subf %84, %83 : vector<8x32xf32>
    %86 = math.exp %85 : vector<8x32xf32>
    %cst_49 = arith.constant 1.000000e+00 : f32
    %87 = vector.broadcast %cst_49 : f32 to vector<8x32xf32>
    %88 = arith.addf %87, %86 : vector<8x32xf32>
    %89 = arith.divf %83, %88 : vector<8x32xf32>
    %c0_50 = arith.constant 0 : index
    %c0_51 = arith.constant 0 : index
    %c0_52 = arith.constant 0 : index
    %90 = vector.load %arg15[%c0_50, %c0_51, %c0_52] : memref<2x32x96xf32, #tpu.memory_space<vmem>>, vector<1x32x96xf32>
    %91 = vector.shape_cast %90 : vector<1x32x96xf32> to vector<32x96xf32>
    %cst_53 = arith.constant dense<0.000000e+00> : vector<8x96xf32>
    %92 = tpu.matmul %89, %91, %cst_53 {dimension_numbers = #tpu.dot_dimension_numbers<[1], [0], [0], [1], [0, 0, 1, 1], [], []>} : vector<8x32xf32>, vector<32x96xf32>, vector<8x96xf32> -> vector<8x96xf32>
    %c0_54 = arith.constant 0 : index
    %c0_55 = arith.constant 0 : index
    %c0_56 = arith.constant 0 : index
    %93 = vector.load %arg16[%c0_54, %c0_55, %c0_56] : memref<2x1x96xf32, #tpu.memory_space<vmem>>, vector<1x1x96xf32>
    %94 = vector.shape_cast %93 : vector<1x1x96xf32> to vector<1x96xf32>
    %95 = vector.broadcast %94 : vector<1x96xf32> to vector<8x96xf32>
    %96 = arith.addf %92, %95 : vector<8x96xf32>
    %97 = vector.extract_strided_slice %96 {offsets = [0, 0], sizes = [8, 32], strides = [1, 1]} : vector<8x96xf32> to vector<8x32xf32>
    %98 = vector.extract_strided_slice %96 {offsets = [0, 32], sizes = [8, 32], strides = [1, 1]} : vector<8x96xf32> to vector<8x32xf32>
    %99 = tpu.concatenate %98, %98, %98 in 1 : vector<8x32xf32>, vector<8x32xf32>, vector<8x32xf32> -> vector<8x96xf32>
    %100 = vector.extract_strided_slice %96 {offsets = [0, 64], sizes = [8, 32], strides = [1, 1]} : vector<8x96xf32> to vector<8x32xf32>
    %101 = arith.addf %53, %97 : vector<8x32xf32>
    %102 = arith.mulf %100, %75 : vector<8x32xf32>
    %103 = arith.addf %101, %102 : vector<8x32xf32>
    %104 = arith.mulf %99, %60 : vector<8x96xf32>
    %105 = arith.addf %55, %104 : vector<8x96xf32>
    %c1 = arith.constant 1 : index
    %c0_57 = arith.constant 0 : index
    %c0_58 = arith.constant 0 : index
    %106 = vector.load %arg6[%c1, %c0_57, %c0_58] : memref<2x16x96xf32, #tpu.memory_space<vmem>>, vector<1x16x96xf32>
    %107 = vector.shape_cast %106 : vector<1x16x96xf32> to vector<16x96xf32>
    %cst_59 = arith.constant dense<0.000000e+00> : vector<16x96xf32>
    %108 = tpu.matmul %0, %107, %cst_59 {dimension_numbers = #tpu.dot_dimension_numbers<[1], [0], [0], [1], [0, 0, 1, 1], [], []>} : vector<16x16xf32>, vector<16x96xf32>, vector<16x96xf32> -> vector<16x96xf32>
    %c1_60 = arith.constant 1 : index
    %c0_61 = arith.constant 0 : index
    %c0_62 = arith.constant 0 : index
    %109 = vector.load %arg7[%c1_60, %c0_61, %c0_62] : memref<2x1x96xf32, #tpu.memory_space<vmem>>, vector<1x1x96xf32>
    %110 = vector.shape_cast %109 : vector<1x1x96xf32> to vector<1x96xf32>
    %111 = vector.broadcast %110 : vector<1x96xf32> to vector<16x96xf32>
    %112 = arith.addf %108, %111 : vector<16x96xf32>
    %113 = arith.mulf %112, %3 : vector<16x96xf32>
    %c1_63 = arith.constant 1 : index
    %c0_64 = arith.constant 0 : index
    %c0_65 = arith.constant 0 : index
    %114 = vector.load %arg8[%c1_63, %c0_64, %c0_65] : memref<2x32x32xf32, #tpu.memory_space<vmem>>, vector<1x32x32xf32>
    %115 = vector.shape_cast %114 : vector<1x32x32xf32> to vector<32x32xf32>
    %cst_66 = arith.constant dense<0.000000e+00> : vector<8x32xf32>
    %116 = tpu.matmul %103, %115, %cst_66 {dimension_numbers = #tpu.dot_dimension_numbers<[1], [0], [0], [1], [0, 0, 1, 1], [], []>} : vector<8x32xf32>, vector<32x32xf32>, vector<8x32xf32> -> vector<8x32xf32>
    %c1_67 = arith.constant 1 : index
    %c0_68 = arith.constant 0 : index
    %c0_69 = arith.constant 0 : index
    %117 = vector.load %arg9[%c1_67, %c0_68, %c0_69] : memref<2x1x32xf32, #tpu.memory_space<vmem>>, vector<1x1x32xf32>
    %118 = vector.shape_cast %117 : vector<1x1x32xf32> to vector<1x32xf32>
    %119 = vector.broadcast %118 : vector<1x32xf32> to vector<8x32xf32>
    %120 = arith.addf %116, %119 : vector<8x32xf32>
    %cst_70 = arith.constant 0.000000e+00 : f32
    %121 = vector.broadcast %cst_70 : f32 to vector<8x32xf32>
    %122 = arith.subf %121, %120 : vector<8x32xf32>
    %123 = math.exp %122 : vector<8x32xf32>
    %cst_71 = arith.constant 1.000000e+00 : f32
    %124 = vector.broadcast %cst_71 : f32 to vector<8x32xf32>
    %125 = arith.addf %124, %123 : vector<8x32xf32>
    %126 = arith.divf %120, %125 : vector<8x32xf32>
    %c1_72 = arith.constant 1 : index
    %c0_73 = arith.constant 0 : index
    %c0_74 = arith.constant 0 : index
    %127 = vector.load %arg10[%c1_72, %c0_73, %c0_74] : memref<2x32x96xf32, #tpu.memory_space<vmem>>, vector<1x32x96xf32>
    %128 = vector.shape_cast %127 : vector<1x32x96xf32> to vector<32x96xf32>
    %cst_75 = arith.constant dense<0.000000e+00> : vector<8x96xf32>
    %129 = tpu.matmul %126, %128, %cst_75 {dimension_numbers = #tpu.dot_dimension_numbers<[1], [0], [0], [1], [0, 0, 1, 1], [], []>} : vector<8x32xf32>, vector<32x96xf32>, vector<8x96xf32> -> vector<8x96xf32>
    %c1_76 = arith.constant 1 : index
    %c0_77 = arith.constant 0 : index
    %c0_78 = arith.constant 0 : index
    %130 = vector.load %arg11[%c1_76, %c0_77, %c0_78] : memref<2x1x96xf32, #tpu.memory_space<vmem>>, vector<1x1x96xf32>
    %131 = vector.shape_cast %130 : vector<1x1x96xf32> to vector<1x96xf32>
    %132 = vector.broadcast %131 : vector<1x96xf32> to vector<8x96xf32>
    %133 = arith.addf %129, %132 : vector<8x96xf32>
    %134 = tpu.concatenate %133, %105 in 1 : vector<8x96xf32>, vector<8x96xf32> -> vector<8x192xf32>
    %cst_79 = arith.constant dense<0.000000e+00> : vector<16x192xf32>
    %135 = tpu.matmul %5, %134, %cst_79 {dimension_numbers = #tpu.dot_dimension_numbers<[1], [0], [0], [1], [0, 0, 1, 1], [], []>} : vector<16x8xf32>, vector<8x192xf32>, vector<16x192xf32> -> vector<16x192xf32>
    %136 = vector.extract_strided_slice %135 {offsets = [0, 0], sizes = [16, 96], strides = [1, 1]} : vector<16x192xf32> to vector<16x96xf32>
    %137 = arith.mulf %113, %136 : vector<16x96xf32>
    %138 = vector.extract_strided_slice %135 {offsets = [0, 96], sizes = [16, 96], strides = [1, 1]} : vector<16x192xf32> to vector<16x96xf32>
    %139 = vector.extract_strided_slice %137 {offsets = [0, 0], sizes = [16, 32], strides = [1, 1]} : vector<16x96xf32> to vector<16x32xf32>
    %140 = vector.extract_strided_slice %137 {offsets = [0, 32], sizes = [16, 32], strides = [1, 1]} : vector<16x96xf32> to vector<16x32xf32>
    %141 = tpu.concatenate %140, %140, %140 in 1 : vector<16x32xf32>, vector<16x32xf32>, vector<16x32xf32> -> vector<16x96xf32>
    %142 = vector.extract_strided_slice %137 {offsets = [0, 64], sizes = [16, 32], strides = [1, 1]} : vector<16x96xf32> to vector<16x32xf32>
    %143 = tpu.concatenate %142, %142, %142 in 1 : vector<16x32xf32>, vector<16x32xf32>, vector<16x32xf32> -> vector<16x96xf32>
    %144 = arith.mulf %141, %4 : vector<16x96xf32>
    %145 = arith.mulf %143, %138 : vector<16x96xf32>
    %146 = arith.addf %144, %145 : vector<16x96xf32>
    %147 = tpu.concatenate %139, %146 in 1 : vector<16x32xf32>, vector<16x96xf32> -> vector<16x128xf32>
    %cst_80 = arith.constant dense<0.000000e+00> : vector<8x128xf32>
    %148 = tpu.matmul %6, %147, %cst_80 {dimension_numbers = #tpu.dot_dimension_numbers<[1], [0], [0], [1], [0, 0, 1, 1], [], []>} : vector<8x16xf32>, vector<16x128xf32>, vector<8x128xf32> -> vector<8x128xf32>
    %149 = vector.extract_strided_slice %148 {offsets = [0, 0], sizes = [8, 32], strides = [1, 1]} : vector<8x128xf32> to vector<8x32xf32>
    %150 = arith.addf %103, %149 : vector<8x32xf32>
    %151 = vector.extract_strided_slice %148 {offsets = [0, 32], sizes = [8, 96], strides = [1, 1]} : vector<8x128xf32> to vector<8x96xf32>
    %152 = arith.addf %105, %151 : vector<8x96xf32>
    %c1_81 = arith.constant 1 : index
    %c0_82 = arith.constant 0 : index
    %c0_83 = arith.constant 0 : index
    %153 = vector.load %arg12[%c1_81, %c0_82, %c0_83] : memref<2x96x192xf32, #tpu.memory_space<vmem>>, vector<1x96x192xf32>
    %154 = vector.shape_cast %153 : vector<1x96x192xf32> to vector<96x192xf32>
    %cst_84 = arith.constant dense<0.000000e+00> : vector<8x192xf32>
    %155 = tpu.matmul %152, %154, %cst_84 {dimension_numbers = #tpu.dot_dimension_numbers<[1], [0], [0], [1], [0, 0, 1, 1], [], []>} : vector<8x96xf32>, vector<96x192xf32>, vector<8x192xf32> -> vector<8x192xf32>
    %156 = vector.extract_strided_slice %155 {offsets = [0, 0], sizes = [8, 96], strides = [1, 1]} : vector<8x192xf32> to vector<8x96xf32>
    %157 = vector.extract_strided_slice %155 {offsets = [0, 96], sizes = [8, 96], strides = [1, 1]} : vector<8x192xf32> to vector<8x96xf32>
    %158 = arith.mulf %156, %156 : vector<8x96xf32>
    %159 = vector.extract_strided_slice %158 {offsets = [0, 0], sizes = [8, 32], strides = [1, 1]} : vector<8x96xf32> to vector<8x32xf32>
    %160 = vector.extract_strided_slice %158 {offsets = [0, 32], sizes = [8, 32], strides = [1, 1]} : vector<8x96xf32> to vector<8x32xf32>
    %161 = arith.addf %159, %160 : vector<8x32xf32>
    %162 = vector.extract_strided_slice %158 {offsets = [0, 64], sizes = [8, 32], strides = [1, 1]} : vector<8x96xf32> to vector<8x32xf32>
    %163 = arith.addf %161, %162 : vector<8x32xf32>
    %cst_85 = arith.constant 9.99999993E-9 : f32
    %164 = vector.broadcast %cst_85 : f32 to vector<8x32xf32>
    %165 = arith.addf %163, %164 : vector<8x32xf32>
    %166 = math.sqrt %165 : vector<8x32xf32>
    %167 = arith.mulf %156, %157 : vector<8x96xf32>
    %168 = vector.extract_strided_slice %167 {offsets = [0, 0], sizes = [8, 32], strides = [1, 1]} : vector<8x96xf32> to vector<8x32xf32>
    %169 = vector.extract_strided_slice %167 {offsets = [0, 32], sizes = [8, 32], strides = [1, 1]} : vector<8x96xf32> to vector<8x32xf32>
    %170 = arith.addf %168, %169 : vector<8x32xf32>
    %171 = vector.extract_strided_slice %167 {offsets = [0, 64], sizes = [8, 32], strides = [1, 1]} : vector<8x96xf32> to vector<8x32xf32>
    %172 = arith.addf %170, %171 : vector<8x32xf32>
    %173 = tpu.concatenate %150, %166 in 1 : vector<8x32xf32>, vector<8x32xf32> -> vector<8x64xf32>
    %c1_86 = arith.constant 1 : index
    %c0_87 = arith.constant 0 : index
    %c0_88 = arith.constant 0 : index
    %174 = vector.load %arg13[%c1_86, %c0_87, %c0_88] : memref<2x64x32xf32, #tpu.memory_space<vmem>>, vector<1x64x32xf32>
    %175 = vector.shape_cast %174 : vector<1x64x32xf32> to vector<64x32xf32>
    %cst_89 = arith.constant dense<0.000000e+00> : vector<8x32xf32>
    %176 = tpu.matmul %173, %175, %cst_89 {dimension_numbers = #tpu.dot_dimension_numbers<[1], [0], [0], [1], [0, 0, 1, 1], [], []>} : vector<8x64xf32>, vector<64x32xf32>, vector<8x32xf32> -> vector<8x32xf32>
    %c1_90 = arith.constant 1 : index
    %c0_91 = arith.constant 0 : index
    %c0_92 = arith.constant 0 : index
    %177 = vector.load %arg14[%c1_90, %c0_91, %c0_92] : memref<2x1x32xf32, #tpu.memory_space<vmem>>, vector<1x1x32xf32>
    %178 = vector.shape_cast %177 : vector<1x1x32xf32> to vector<1x32xf32>
    %179 = vector.broadcast %178 : vector<1x32xf32> to vector<8x32xf32>
    %180 = arith.addf %176, %179 : vector<8x32xf32>
    %cst_93 = arith.constant 0.000000e+00 : f32
    %181 = vector.broadcast %cst_93 : f32 to vector<8x32xf32>
    %182 = arith.subf %181, %180 : vector<8x32xf32>
    %183 = math.exp %182 : vector<8x32xf32>
    %cst_94 = arith.constant 1.000000e+00 : f32
    %184 = vector.broadcast %cst_94 : f32 to vector<8x32xf32>
    %185 = arith.addf %184, %183 : vector<8x32xf32>
    %186 = arith.divf %180, %185 : vector<8x32xf32>
    %c1_95 = arith.constant 1 : index
    %c0_96 = arith.constant 0 : index
    %c0_97 = arith.constant 0 : index
    %187 = vector.load %arg15[%c1_95, %c0_96, %c0_97] : memref<2x32x96xf32, #tpu.memory_space<vmem>>, vector<1x32x96xf32>
    %188 = vector.shape_cast %187 : vector<1x32x96xf32> to vector<32x96xf32>
    %cst_98 = arith.constant dense<0.000000e+00> : vector<8x96xf32>
    %189 = tpu.matmul %186, %188, %cst_98 {dimension_numbers = #tpu.dot_dimension_numbers<[1], [0], [0], [1], [0, 0, 1, 1], [], []>} : vector<8x32xf32>, vector<32x96xf32>, vector<8x96xf32> -> vector<8x96xf32>
    %c1_99 = arith.constant 1 : index
    %c0_100 = arith.constant 0 : index
    %c0_101 = arith.constant 0 : index
    %190 = vector.load %arg16[%c1_99, %c0_100, %c0_101] : memref<2x1x96xf32, #tpu.memory_space<vmem>>, vector<1x1x96xf32>
    %191 = vector.shape_cast %190 : vector<1x1x96xf32> to vector<1x96xf32>
    %192 = vector.broadcast %191 : vector<1x96xf32> to vector<8x96xf32>
    %193 = arith.addf %189, %192 : vector<8x96xf32>
    %194 = vector.extract_strided_slice %193 {offsets = [0, 0], sizes = [8, 32], strides = [1, 1]} : vector<8x96xf32> to vector<8x32xf32>
    %195 = vector.extract_strided_slice %193 {offsets = [0, 32], sizes = [8, 32], strides = [1, 1]} : vector<8x96xf32> to vector<8x32xf32>
    %196 = tpu.concatenate %195, %195, %195 in 1 : vector<8x32xf32>, vector<8x32xf32>, vector<8x32xf32> -> vector<8x96xf32>
    %197 = vector.extract_strided_slice %193 {offsets = [0, 64], sizes = [8, 32], strides = [1, 1]} : vector<8x96xf32> to vector<8x32xf32>
    %198 = arith.addf %150, %194 : vector<8x32xf32>
    %199 = arith.mulf %197, %172 : vector<8x32xf32>
    %200 = arith.addf %198, %199 : vector<8x32xf32>
    %201 = arith.mulf %196, %157 : vector<8x96xf32>
    %202 = arith.addf %152, %201 : vector<8x96xf32>
    %c0_102 = arith.constant 0 : index
    %c0_103 = arith.constant 0 : index
    %203 = vector.load %arg21[%c0_102, %c0_103] : memref<8x32xf32, #tpu.memory_space<vmem>>, vector<8x32xf32>
    tpu.vector_store %arg21[%c0_102, %c0_103], %200 {strides = array<i32>} : memref<8x32xf32, #tpu.memory_space<vmem>>, vector<8x32xf32>,
    %c0_104 = arith.constant 0 : index
    %c0_105 = arith.constant 0 : index
    %204 = vector.load %arg22[%c0_104, %c0_105] : memref<8x96xf32, #tpu.memory_space<vmem>>, vector<8x96xf32>
    tpu.vector_store %arg22[%c0_104, %c0_105], %202 {strides = array<i32>} : memref<8x96xf32, #tpu.memory_space<vmem>>, vector<8x96xf32>,
    %c0_106 = arith.constant 0 : index
    %c0_107 = arith.constant 0 : index
    %205 = vector.load %arg17[%c0_106, %c0_107] : memref<32x32xf32, #tpu.memory_space<vmem>>, vector<32x32xf32>
    %cst_108 = arith.constant dense<0.000000e+00> : vector<8x32xf32>
    %206 = tpu.matmul %200, %205, %cst_108 {dimension_numbers = #tpu.dot_dimension_numbers<[1], [0], [0], [1], [0, 0, 1, 1], [], []>} : vector<8x32xf32>, vector<32x32xf32>, vector<8x32xf32> -> vector<8x32xf32>
    %c0_109 = arith.constant 0 : index
    %c0_110 = arith.constant 0 : index
    %207 = vector.load %arg18[%c0_109, %c0_110] : memref<1x32xf32, #tpu.memory_space<vmem>>, vector<1x32xf32>
    %208 = vector.broadcast %207 : vector<1x32xf32> to vector<8x32xf32>
    %209 = arith.addf %206, %208 : vector<8x32xf32>
    %cst_111 = arith.constant 0.000000e+00 : f32
    %210 = vector.broadcast %cst_111 : f32 to vector<8x32xf32>
    %211 = arith.subf %210, %209 : vector<8x32xf32>
    %212 = math.exp %211 : vector<8x32xf32>
    %cst_112 = arith.constant 1.000000e+00 : f32
    %213 = vector.broadcast %cst_112 : f32 to vector<8x32xf32>
    %214 = arith.addf %213, %212 : vector<8x32xf32>
    %215 = arith.divf %209, %214 : vector<8x32xf32>
    %c0_113 = arith.constant 0 : index
    %c0_114 = arith.constant 0 : index
    %216 = vector.load %arg19[%c0_113, %c0_114] : memref<1x32xf32, #tpu.memory_space<vmem>>, vector<1x32xf32>
    %217 = vector.broadcast %216 : vector<1x32xf32> to vector<8x32xf32>
    %218 = arith.mulf %215, %217 : vector<8x32xf32>
    %cst_115 = arith.constant dense<0.000000e+00> : vector<8xf32>
    %219 = vector.multi_reduction <add>, %218, %cst_115 [1] : vector<8x32xf32> to vector<8xf32>
    %220 = vector.shape_cast %219 : vector<8xf32> to vector<8x1xf32>
    %c0_116 = arith.constant 0 : index
    %c0_117 = arith.constant 0 : index
    %221 = vector.load %arg20[%c0_116, %c0_117] : memref<1x1xf32, #tpu.memory_space<vmem>>, vector<1x1xf32>
    %222 = vector.broadcast %221 : vector<1x1xf32> to vector<8x1xf32>
    %223 = arith.addf %220, %222 : vector<8x1xf32>
    %c0_118 = arith.constant 0 : index
    %c0_119 = arith.constant 0 : index
    %224 = vector.load %arg23[%c0_118, %c0_119] : memref<8x1xf32, #tpu.memory_space<vmem>>, vector<8x1xf32>
    tpu.vector_store %arg23[%c0_118, %c0_119], %223 {strides = array<i32>} : memref<8x1xf32, #tpu.memory_space<vmem>>, vector<8x1xf32>,
    return
  }
}

</mosaic_0001>

<llo_original>
// kernel: painn_forward.1
$region0: #{painn_forward.1}
  #allocation0 [shape = 'u32[]', space=smem, size = 0x4, offset = 0x4, fixed_abs, tag = 'smem constant byte address 0x4 - core index']
  #allocation1 [shape = 'u32[144,128]{1,0:T(1,128)}', space=vmem, size = 0x12000, scoped, tag = 'internal scratch']
  #allocation2 [shape = 'f32[1,1]{1,0:T(1,128)S(1)}', space=vmem, size = 0x200, scoped, tag = 'scoped memory for painn_forward.1']
  %s0 = inlined_call_operand.vmem [shape: f32[16,16], index: 0, kind: input, shape index: {}]
  %s1 = inlined_call_operand.vmem [shape: f32[16,1], index: 1, kind: input, shape index: {}]
  %s2 = inlined_call_operand.vmem [shape: f32[16,96], index: 2, kind: input, shape index: {}]
  %s3 = inlined_call_operand.vmem [shape: f32[8,32], index: 3, kind: input, shape index: {}]
  %s4 = inlined_call_operand.vmem [shape: f32[16,8], index: 4, kind: input, shape index: {}]
  %s5 = inlined_call_operand.vmem [shape: f32[8,16], index: 5, kind: input, shape index: {}]
  %s6 = inlined_call_operand.vmem [shape: f32[2,16,96], index: 6, kind: input, shape index: {}]
  %s7 = inlined_call_operand.vmem [shape: f32[2,1,96], index: 7, kind: input, shape index: {}]
  %s8 = inlined_call_operand.vmem [shape: f32[2,32,32], index: 8, kind: input, shape index: {}]
  %s9 = inlined_call_operand.vmem [shape: f32[2,1,32], index: 9, kind: input, shape index: {}]
  %s10 = inlined_call_operand.vmem [shape: f32[2,32,96], index: 10, kind: input, shape index: {}]
  %s11 = inlined_call_operand.vmem [shape: f32[2,1,96], index: 11, kind: input, shape index: {}]
  %s12 = inlined_call_operand.vmem [shape: f32[2,96,192], index: 12, kind: input, shape index: {}]
  %s13 = inlined_call_operand.vmem [shape: f32[2,64,32], index: 13, kind: input, shape index: {}]
  %s14 = inlined_call_operand.vmem [shape: f32[2,1,32], index: 14, kind: input, shape index: {}]
  %s15 = inlined_call_operand.vmem [shape: f32[2,32,96], index: 15, kind: input, shape index: {}]
  %s16 = inlined_call_operand.vmem [shape: f32[2,1,96], index: 16, kind: input, shape index: {}]
  %s17 = inlined_call_operand.vmem [shape: f32[32,32], index: 17, kind: input, shape index: {}]
  %s18 = inlined_call_operand.vmem [shape: f32[1,32], index: 18, kind: input, shape index: {}]
  %s19 = inlined_call_operand.vmem [shape: f32[1,32], index: 19, kind: input, shape index: {}]
  %s20 = inlined_call_operand.<no memory space> [shape: f32[1,1], index: 20, kind: input, shape index: {}]
  %s21 = inlined_call_operand.hbm [shape: f32[8,32], index: 21, kind: output, shape index: {0}]
  %s22 = inlined_call_operand.vmem [shape: f32[8,96], index: 22, kind: output, shape index: {1}]
  %s23 = inlined_call_operand.vmem [shape: f32[8,1], index: 23, kind: output, shape index: {2}]
  %24 = xla_tuple %s21, %s22, %s23
  %s25 = sld [smem:[#allocation0]]
  $region110: #{painn_forward.1} parent=0
    _
  %s27 = ssub.s32 1, %s25
  %s28 = scalar_select 0, %s27, %s25
  %v29 = vstv %s20
  %30 = vst [vmem:[#allocation2] sm:$0x1] %v29
  $region1: #{painn_forward.1} parent=0
    #allocation3 [shape = 'u8[4096]{0}', space=vmem, size = 0x1000, scoped, tag = 'output window, operand 0, single buffered']
    #allocation4 [shape = 's32[1]{0}', space=sflag, size = 0x4, scoped, tag = 'scoped memory for painn_forward.1']
    %31 = vsyncpa [#allocation4], 0
    // Predicated region
    $region2: #{painn_forward.1} parent=1 // pred_check
      _
    $region3: #{painn_forward.1} parent=1 // pred_check_branch
      %33 = sbr.rel (0) target = $region5
    $region4: #{painn_forward.1} parent=1 // pred_region
      _
    $region5: #{painn_forward.1} parent=1 // pred_fallthru
      _
    // Predicated region
    $region6: #{painn_forward.1} parent=1 // pred_check
      _
    $region7: #{painn_forward.1} parent=1 // pred_check_branch
      %35 = sbr.rel (0) target = $region9
    $region8: #{painn_forward.1} parent=1 // pred_region
      _
    $region9: #{painn_forward.1} parent=1 // pred_fallthru
      _
    // Predicated region
    $region10: #{painn_forward.1} parent=1 // pred_check
      _
    $region11: #{painn_forward.1} parent=1 // pred_check_branch
      %37 = sbr.rel (0) target = $region13
    $region12: #{painn_forward.1} parent=1 // pred_region
      _
    $region13: #{painn_forward.1} parent=1 // pred_fallthru
      _
    // Predicated region
    $region14: #{painn_forward.1} parent=1 // pred_check
      _
    $region15: #{painn_forward.1} parent=1 // pred_check_branch
      %39 = sbr.rel (0) target = $region17
    $region16: #{painn_forward.1} parent=1 // pred_region
      _
    $region17: #{painn_forward.1} parent=1 // pred_fallthru
      _
    // Predicated region
    $region18: #{painn_forward.1} parent=1 // pred_check
      _
    $region19: #{painn_forward.1} parent=1 // pred_check_branch
      %41 = sbr.rel (0) target = $region21
    $region20: #{painn_forward.1} parent=1 // pred_region
      _
    $region21: #{painn_forward.1} parent=1 // pred_fallthru
      _
    // Predicated region
    $region22: #{painn_forward.1} parent=1 // pred_check
      _
    $region23: #{painn_forward.1} parent=1 // pred_check_branch
      %43 = sbr.rel (0) target = $region25
    $region24: #{painn_forward.1} parent=1 // pred_region
      _
    $region25: #{painn_forward.1} parent=1 // pred_fallthru
      _
    // Predicated region
    $region26: #{painn_forward.1} parent=1 // pred_check
      _
    $region27: #{painn_forward.1} parent=1 // pred_check_branch
      %45 = sbr.rel (0) target = $region29
    $region28: #{painn_forward.1} parent=1 // pred_region
      _
    $region29: #{painn_forward.1} parent=1 // pred_fallthru
      _
    // Predicated region
    $region30: #{painn_forward.1} parent=1 // pred_check
      _
    $region31: #{painn_forward.1} parent=1 // pred_check_branch
      %47 = sbr.rel (0) target = $region33
    $region32: #{painn_forward.1} parent=1 // pred_region
      _
    $region33: #{painn_forward.1} parent=1 // pred_fallthru
      _
    // Predicated region
    $region34: #{painn_forward.1} parent=1 // pred_check
      _
    $region35: #{painn_forward.1} parent=1 // pred_check_branch
      %49 = sbr.rel (0) target = $region37
    $region36: #{painn_forward.1} parent=1 // pred_region
      _
    $region37: #{painn_forward.1} parent=1 // pred_fallthru
      _
    // Predicated region
    $region38: #{painn_forward.1} parent=1 // pred_check
      _
    $region39: #{painn_forward.1} parent=1 // pred_check_branch
      %51 = sbr.rel (0) target = $region41
    $region40: #{painn_forward.1} parent=1 // pred_region
      _
    $region41: #{painn_forward.1} parent=1 // pred_fallthru
      _
    // Predicated region
    $region42: #{painn_forward.1} parent=1 // pred_check
      _
    $region43: #{painn_forward.1} parent=1 // pred_check_branch
      %53 = sbr.rel (0) target = $region45
    $region44: #{painn_forward.1} parent=1 // pred_region
      _
    $region45: #{painn_forward.1} parent=1 // pred_fallthru
      _
    // Predicated region
    $region46: #{painn_forward.1} parent=1 // pred_check
      _
    $region47: #{painn_forward.1} parent=1 // pred_check_branch
      %55 = sbr.rel (0) target = $region49
    $region48: #{painn_forward.1} parent=1 // pred_region
      _
    $region49: #{painn_forward.1} parent=1 // pred_fallthru
      _
    // Predicated region
    $region50: #{painn_forward.1} parent=1 // pred_check
      _
    $region51: #{painn_forward.1} parent=1 // pred_check_branch
      %57 = sbr.rel (0) target = $region53
    $region52: #{painn_forward.1} parent=1 // pred_region
      _
    $region53: #{painn_forward.1} parent=1 // pred_fallthru
      _
    // Predicated region
    $region54: #{painn_forward.1} parent=1 // pred_check
      _
    $region55: #{painn_forward.1} parent=1 // pred_check_branch
      %59 = sbr.rel (0) target = $region57
    $region56: #{painn_forward.1} parent=1 // pred_region
      _
    $region57: #{painn_forward.1} parent=1 // pred_fallthru
      _
    // Predicated region
    $region58: #{painn_forward.1} parent=1 // pred_check
      _
    $region59: #{painn_forward.1} parent=1 // pred_check_branch
      %61 = sbr.rel (0) target = $region61
    $region60: #{painn_forward.1} parent=1 // pred_region
      _
    $region61: #{painn_forward.1} parent=1 // pred_fallthru
      _
    // Predicated region
    $region62: #{painn_forward.1} parent=1 // pred_check
      _
    $region63: #{painn_forward.1} parent=1 // pred_check_branch
      %63 = sbr.rel (0) target = $region65
    $region64: #{painn_forward.1} parent=1 // pred_region
      _
    $region65: #{painn_forward.1} parent=1 // pred_fallthru
      _
    // Predicated region
    $region66: #{painn_forward.1} parent=1 // pred_check
      _
    $region67: #{painn_forward.1} parent=1 // pred_check_branch
      %65 = sbr.rel (0) target = $region69
    $region68: #{painn_forward.1} parent=1 // pred_region
      _
    $region69: #{painn_forward.1} parent=1 // pred_fallthru
      _
    // Predicated region
    $region70: #{painn_forward.1} parent=1 // pred_check
      _
    $region71: #{painn_forward.1} parent=1 // pred_check_branch
      %67 = sbr.rel (0) target = $region73
    $region72: #{painn_forward.1} parent=1 // pred_region
      _
    $region73: #{painn_forward.1} parent=1 // pred_fallthru
      _
    // Predicated region
    $region74: #{painn_forward.1} parent=1 // pred_check
      _
    $region75: #{painn_forward.1} parent=1 // pred_check_branch
      %69 = sbr.rel (0) target = $region77
    $region76: #{painn_forward.1} parent=1 // pred_region
      _
    $region77: #{painn_forward.1} parent=1 // pred_fallthru
      _
    // Predicated region
    $region78: #{painn_forward.1} parent=1 // pred_check
      _
    $region79: #{painn_forward.1} parent=1 // pred_check_branch
      %71 = sbr.rel (0) target = $region81
    $region80: #{painn_forward.1} parent=1 // pred_region
      _
    $region81: #{painn_forward.1} parent=1 // pred_fallthru
      _
    // Predicated region
    $region82: #{painn_forward.1} parent=1 // pred_check
      _
    $region83: #{painn_forward.1} parent=1 // pred_check_branch
      %73 = sbr.rel (0) target = $region85
    $region84: #{painn_forward.1} parent=1 // pred_region
      _
    $region85: #{painn_forward.1} parent=1 // pred_fallthru
      _
    %v74 = vld [vmem:[%s0] sm:$0xff]
    %v75 = vld [vmem:[%s0 + $0x8] sm:$0xff]
    %v76 = vld [vmem:[%s1] sm:$0xff]
    %v77 = vld [vmem:[%s1 + $0x8] sm:$0xff]
    %79 = vset.pattern.permute.xlu0 0
    %80 = vperm.xlu0 %79, %v76
    %v81 = vpop.permute.xlu0 %80
    %84 = vset.pattern.permute.xlu0 0
    %85 = vperm.xlu0 %84, %v77
    %v86 = vpop.permute.xlu0 %85
    %v88 = vld [vmem:[%s2] sm:$0xff]
    %v89 = vld [vmem:[%s2 + $0x8] sm:$0xff]
    %v90 = vld [vmem:[%s4] sm:$0xff]
    %v91 = vld [vmem:[%s4 + $0x8] sm:$0xff]
    %v92 = vld [vmem:[%s5] sm:$0xff]
    %v93 = vld [vmem:[%s3] sm:$0xff]
    %v94 = vld [vmem:[%s6] sm:$0xff]
    %v95 = vld [vmem:[%s6 + $0x8] sm:$0xff]
    %v96 = vld [vmem:[%s7] sm:$0x1]
    %v98 = vlaneseq
    %v99 = vshrl.u32 %v98, 7
    %v100 = vsub.s32 0, %v99
    %v101 = vrot.slane %v96, %v100
    %vm103 = vcmask 130048
    %v105 = vsel %vm103, %v74, 0
    %v108 = vsel %vm103, %v75, 0
    %110 = vmatprep.subr.mxu0 0.0
    %111 = vmatpush1.msra.mxu0 %v94
    %112 = vmatprep.subr.mxu0 0.0
    %113 = vmatpush1.msra.mxu0 %v95
    %114 = vmatprep.subr.mxu0 0.0
    %115 = vmatpush1.msra.mxu0 0.0
    %116 = vmatprep.subr.mxu0 0.0
    %117 = vmatpush1.msra.mxu0 0.0
    %118 = vmatprep.subr.mxu0 0.0
    %119 = vmatpush1.msra.mxu0 0.0
    %120 = vmatprep.subr.mxu0 0.0
    %121 = vmatpush1.msra.mxu0 0.0
    %122 = vmatprep.subr.mxu0 0.0
    %123 = vmatpush1.msra.mxu0 0.0
    %124 = vmatprep.subr.mxu0 0.0
    %125 = vmatpush1.msra.mxu0 0.0
    %126 = vmatprep.subr.mxu0 0.0
    %127 = vmatpush1.msra.mxu0 0.0
    %128 = vmatprep.subr.mxu0 0.0
    %129 = vmatpush1.msra.mxu0 0.0
    %130 = vmatprep.subr.mxu0 0.0
    %131 = vmatpush1.msra.mxu0 0.0
    %132 = vmatprep.subr.mxu0 0.0
    %133 = vmatpush1.msra.mxu0 0.0
    %134 = vmatprep.subr.mxu0 0.0
    %135 = vmatpush1.msra.mxu0 0.0
    %136 = vmatprep.subr.mxu0 0.0
    %137 = vmatpush1.msra.mxu0 0.0
    %138 = vmatprep.subr.mxu0 0.0
    %139 = vmatpush1.msra.mxu0 0.0
    %140 = vmatprep.subr.mxu0 0.0
    %141 = vmatpush1.msra.mxu0 0.0
    %142 = vmatprep.subr.mxu0 0.0
    %143 = vmatpush1.msra.mxu0 0.0
    %144 = vmatprep.subr.mxu0 0.0
    %145 = vmatpush1.msra.mxu0 0.0
    %146 = vmatprep.subr.mxu0 0.0
    %147 = vmatpush1.msra.mxu0 0.0
    %148 = vmatprep.subr.mxu0 0.0
    %149 = vmatpush1.msra.mxu0 0.0
    %150 = vmatprep.subr.mxu0 0.0
    %151 = vmatpush1.msra.mxu0 0.0
    %152 = vmatprep.subr.mxu0 0.0
    %153 = vmatpush1.msra.mxu0 0.0
    %154 = vmatprep.subr.mxu0 0.0
    %155 = vmatpush1.msra.mxu0 0.0
    %156 = vmatprep.subr.mxu0 0.0
    %157 = vmatpush1.msra.mxu0 0.0
    %158 = vmatprep.subr.mxu0 0.0
    %159 = vmatpush1.msra.mxu0 0.0
    %160 = vmatprep.subr.mxu0 0.0
    %161 = vmatpush1.msra.mxu0 0.0
    %162 = vmatprep.subr.mxu0 0.0
    %163 = vmatpush1.msra.mxu0 0.0
    %164 = vmatprep.subr.mxu0 0.0
    %165 = vmatpush1.msra.mxu0 0.0
    %166 = vmatprep.subr.mxu0 0.0
    %167 = vmatpush1.msra.mxu0 0.0
    %168 = vmatprep.subr.mxu0 0.0
    %169 = vmatpush1.msra.mxu0 0.0
    %170 = vmatprep.subr.mxu0 0.0
    %171 = vmatpush1.msra.mxu0 0.0
    %172 = vmatprep.subr.mxu0 0.0
    %173 = vmatpush1.msra.mxu0 0.0
    %174 = vmatprep.mubr.f32.mxu0 0.0
    %175 = vmatmul.mubr.f32.gmra.mrb[0].mxu0 %v105
    %v176 = vpop.f32.mrb[0].mxu0
    %v177 = vadd.f32 %v101, %v176
    %v178 = vpop.f32.mrb[0].mxu0
    %179 = vmatprep.mubr.f32.mxu0 0.0
    %180 = vmatmul.mubr.f32.gmra.mrb[0].mxu0 %v108
    %v181 = vpop.f32.mrb[0].mxu0
    %v182 = vadd.f32 %v101, %v181
    %v183 = vpop.f32.mrb[0].mxu0
    %184 = vdwg.mxu0
    %v185 = vmul.f32 %v177, %v81
    %v186 = vmul.f32 %v182, %v86
    %v187 = vld [vmem:[%s8] sm:$0xff]
    %v188 = vld [vmem:[%s8 + $0x8] sm:$0xff]
    %v189 = vld [vmem:[%s8 + $0x10] sm:$0xff]
    %v190 = vld [vmem:[%s8 + $0x18] sm:$0xff]
    %v191 = vld [vmem:[%s9] sm:$0x1]
    %v193 = vlaneseq
    %v194 = vshrl.u32 %v193, 7
    %v195 = vsub.s32 0, %v194
    %v196 = vrot.slane %v191, %v195
    %vm198 = vcmask 261120
    %v200 = vsel %vm198, %v93, 0
    %202 = vmatprep.subr.mxu0 0.0
    %203 = vmatpush1.msra.mxu0 %v187
    %204 = vmatprep.subr.mxu0 0.0
    %205 = vmatpush1.msra.mxu0 %v188
    %206 = vmatprep.subr.mxu0 0.0
    %207 = vmatpush1.msra.mxu0 %v189
    %208 = vmatprep.subr.mxu0 0.0
    %209 = vmatpush1.msra.mxu0 %v190
    %210 = vmatprep.subr.mxu0 0.0
    %211 = vmatpush1.msra.mxu0 0.0
    %212 = vmatprep.subr.mxu0 0.0
    %213 = vmatpush1.msra.mxu0 0.0
    %214 = vmatprep.subr.mxu0 0.0
    %215 = vmatpush1.msra.mxu0 0.0
    %216 = vmatprep.subr.mxu0 0.0
    %217 = vmatpush1.msra.mxu0 0.0
    %218 = vmatprep.subr.mxu0 0.0
    %219 = vmatpush1.msra.mxu0 0.0
    %220 = vmatprep.subr.mxu0 0.0
    %221 = vmatpush1.msra.mxu0 0.0
    %222 = vmatprep.subr.mxu0 0.0
    %223 = vmatpush1.msra.mxu0 0.0
    %224 = vmatprep.subr.mxu0 0.0
    %225 = vmatpush1.msra.mxu0 0.0
    %226 = vmatprep.subr.mxu0 0.0
    %227 = vmatpush1.msra.mxu0 0.0
    %228 = vmatprep.subr.mxu0 0.0
    %229 = vmatpush1.msra.mxu0 0.0
    %230 = vmatprep.subr.mxu0 0.0
    %231 = vmatpush1.msra.mxu0 0.0
    %232 = vmatprep.subr.mxu0 0.0
    %233 = vmatpush1.msra.mxu0 0.0
    %234 = vmatprep.subr.mxu0 0.0
    %235 = vmatpush1.msra.mxu0 0.0
    %236 = vmatprep.subr.mxu0 0.0
    %237 = vmatpush1.msra.mxu0 0.0
    %238 = vmatprep.subr.mxu0 0.0
    %239 = vmatpush1.msra.mxu0 0.0
    %240 = vmatprep.subr.mxu0 0.0
    %241 = vmatpush1.msra.mxu0 0.0
    %242 = vmatprep.subr.mxu0 0.0
    %243 = vmatpush1.msra.mxu0 0.0
    %244 = vmatprep.subr.mxu0 0.0
    %245 = vmatpush1.msra.mxu0 0.0
    %246 = vmatprep.subr.mxu0 0.0
    %247 = vmatpush1.msra.mxu0 0.0
    %248 = vmatprep.subr.mxu0 0.0
    %249 = vmatpush1.msra.mxu0 0.0
    %250 = vmatprep.subr.mxu0 0.0
    %251 = vmatpush1.msra.mxu0 0.0
    %252 = vmatprep.subr.mxu0 0.0
    %253 = vmatpush1.msra.mxu0 0.0
    %254 = vmatprep.subr.mxu0 0.0
    %255 = vmatpush1.msra.mxu0 0.0
    %256 = vmatprep.subr.mxu0 0.0
    %257 = vmatpush1.msra.mxu0 0.0
    %258 = vmatprep.subr.mxu0 0.0
    %259 = vmatpush1.msra.mxu0 0.0
    %260 = vmatprep.subr.mxu0 0.0
    %261 = vmatpush1.msra.mxu0 0.0
    %262 = vmatprep.subr.mxu0 0.0
    %263 = vmatpush1.msra.mxu0 0.0
    %264 = vmatprep.subr.mxu0 0.0
    %265 = vmatpush1.msra.mxu0 0.0
    %266 = vmatprep.mubr.f32.mxu0 0.0
    %267 = vmatmul.mubr.f32.gmra.mrb[0].mxu0 %v200
    %v268 = vpop.f32.mrb[0].mxu0
    %v269 = vadd.f32 %v196, %v268
    %v270 = vpop.f32.mrb[0].mxu0
    %271 = vdwg.mxu0
    %v272 = vsub.f32 0.0, %v269
    %v273 = vmul.f32 %v272, 1.442695
    %v274 = vpow.pop %v273
    %v275 = vadd.f32 %v274, 1.0
    %v276 = vrcp.pop %v275
    %v277 = vmul.f32 %v269, %v276
    %v278 = vld [vmem:[%s10] sm:$0xff]
    %v279 = vld [vmem:[%s10 + $0x8] sm:$0xff]
    %v280 = vld [vmem:[%s10 + $0x10] sm:$0xff]
    %v281 = vld [vmem:[%s10 + $0x18] sm:$0xff]
    %v282 = vld [vmem:[%s11] sm:$0x1]
    %v284 = vlaneseq
    %v285 = vshrl.u32 %v284, 7
    %v286 = vsub.s32 0, %v285
    %v287 = vrot.slane %v282, %v286
    %v290 = vsel %vm198, %v277, 0
    %292 = vmatprep.subr.mxu0 0.0
    %293 = vmatpush1.msra.mxu0 %v278
    %294 = vmatprep.subr.mxu0 0.0
    %295 = vmatpush1.msra.mxu0 %v279
    %296 = vmatprep.subr.mxu0 0.0
    %297 = vmatpush1.msra.mxu0 %v280
    %298 = vmatprep.subr.mxu0 0.0
    %299 = vmatpush1.msra.mxu0 %v281
    %300 = vmatprep.subr.mxu0 0.0
    %301 = vmatpush1.msra.mxu0 0.0
    %302 = vmatprep.subr.mxu0 0.0
    %303 = vmatpush1.msra.mxu0 0.0
    %304 = vmatprep.subr.mxu0 0.0
    %305 = vmatpush1.msra.mxu0 0.0
    %306 = vmatprep.subr.mxu0 0.0
    %307 = vmatpush1.msra.mxu0 0.0
    %308 = vmatprep.subr.mxu0 0.0
    %309 = vmatpush1.msra.mxu0 0.0
    %310 = vmatprep.subr.mxu0 0.0
    %311 = vmatpush1.msra.mxu0 0.0
    %312 = vmatprep.subr.mxu0 0.0
    %313 = vmatpush1.msra.mxu0 0.0
    %314 = vmatprep.subr.mxu0 0.0
    %315 = vmatpush1.msra.mxu0 0.0
    %316 = vmatprep.subr.mxu0 0.0
    %317 = vmatpush1.msra.mxu0 0.0
    %318 = vmatprep.subr.mxu0 0.0
    %319 = vmatpush1.msra.mxu0 0.0
    %320 = vmatprep.subr.mxu0 0.0
    %321 = vmatpush1.msra.mxu0 0.0
    %322 = vmatprep.subr.mxu0 0.0
    %323 = vmatpush1.msra.mxu0 0.0
    %324 = vmatprep.subr.mxu0 0.0
    %325 = vmatpush1.msra.mxu0 0.0
    %326 = vmatprep.subr.mxu0 0.0
    %327 = vmatpush1.msra.mxu0 0.0
    %328 = vmatprep.subr.mxu0 0.0
    %329 = vmatpush1.msra.mxu0 0.0
    %330 = vmatprep.subr.mxu0 0.0
    %331 = vmatpush1.msra.mxu0 0.0
    %332 = vmatprep.subr.mxu0 0.0
    %333 = vmatpush1.msra.mxu0 0.0
    %334 = vmatprep.subr.mxu0 0.0
    %335 = vmatpush1.msra.mxu0 0.0
    %336 = vmatprep.subr.mxu0 0.0
    %337 = vmatpush1.msra.mxu0 0.0
    %338 = vmatprep.subr.mxu0 0.0
    %339 = vmatpush1.msra.mxu0 0.0
    %340 = vmatprep.subr.mxu0 0.0
    %341 = vmatpush1.msra.mxu0 0.0
    %342 = vmatprep.subr.mxu0 0.0
    %343 = vmatpush1.msra.mxu0 0.0
    %344 = vmatprep.subr.mxu0 0.0
    %345 = vmatpush1.msra.mxu0 0.0
    %346 = vmatprep.subr.mxu0 0.0
    %347 = vmatpush1.msra.mxu0 0.0
    %348 = vmatprep.subr.mxu0 0.0
    %349 = vmatpush1.msra.mxu0 0.0
    %350 = vmatprep.subr.mxu0 0.0
    %351 = vmatpush1.msra.mxu0 0.0
    %352 = vmatprep.subr.mxu0 0.0
    %353 = vmatpush1.msra.mxu0 0.0
    %354 = vmatprep.subr.mxu0 0.0
    %355 = vmatpush1.msra.mxu0 0.0
    %356 = vmatprep.mubr.f32.mxu0 0.0
    %357 = vmatmul.mubr.f32.gmra.mrb[0].mxu0 %v290
    %v358 = vpop.f32.mrb[0].mxu0
    %v359 = vadd.f32 %v287, %v358
    %v360 = vpop.f32.mrb[0].mxu0
    %361 = vdwg.mxu0
    %vm362 = vcmask 785408
    %v363 = vsel %vm362, %v359, 0.0
    %vm364 = vcmask 64512
    %v366 = vsel %vm364, %v90, 0
    %v369 = vsel %vm364, %v91, 0
    %371 = vmatprep.subr.mxu0 0.0
    %372 = vmatpush1.msra.mxu0 %v363
    %373 = vmatprep.subr.mxu0 0.0
    %374 = vmatpush1.msra.mxu0 0.0
    %375 = vmatprep.subr.mxu0 0.0
    %376 = vmatpush1.msra.mxu0 0.0
    %377 = vmatprep.subr.mxu0 0.0
    %378 = vmatpush1.msra.mxu0 0.0
    %379 = vmatprep.subr.mxu0 0.0
    %380 = vmatpush1.msra.mxu0 0.0
    %381 = vmatprep.subr.mxu0 0.0
    %382 = vmatpush1.msra.mxu0 0.0
    %383 = vmatprep.subr.mxu0 0.0
    %384 = vmatpush1.msra.mxu0 0.0
    %385 = vmatprep.subr.mxu0 0.0
    %386 = vmatpush1.msra.mxu0 0.0
    %387 = vmatprep.subr.mxu0 0.0
    %388 = vmatpush1.msra.mxu0 0.0
    %389 = vmatprep.subr.mxu0 0.0
    %390 = vmatpush1.msra.mxu0 0.0
    %391 = vmatprep.subr.mxu0 0.0
    %392 = vmatpush1.msra.mxu0 0.0
    %393 = vmatprep.subr.mxu0 0.0
    %394 = vmatpush1.msra.mxu0 0.0
    %395 = vmatprep.subr.mxu0 0.0
    %396 = vmatpush1.msra.mxu0 0.0
    %397 = vmatprep.subr.mxu0 0.0
    %398 = vmatpush1.msra.mxu0 0.0
    %399 = vmatprep.subr.mxu0 0.0
    %400 = vmatpush1.msra.mxu0 0.0
    %401 = vmatprep.subr.mxu0 0.0
    %402 = vmatpush1.msra.mxu0 0.0
    %403 = vmatprep.subr.mxu0 0.0
    %404 = vmatpush1.msra.mxu0 0.0
    %405 = vmatprep.subr.mxu0 0.0
    %406 = vmatpush1.msra.mxu0 0.0
    %407 = vmatprep.subr.mxu0 0.0
    %408 = vmatpush1.msra.mxu0 0.0
    %409 = vmatprep.subr.mxu0 0.0
    %410 = vmatpush1.msra.mxu0 0.0
    %411 = vmatprep.subr.mxu0 0.0
    %412 = vmatpush1.msra.mxu0 0.0
    %413 = vmatprep.subr.mxu0 0.0
    %414 = vmatpush1.msra.mxu0 0.0
    %415 = vmatprep.subr.mxu0 0.0
    %416 = vmatpush1.msra.mxu0 0.0
    %417 = vmatprep.subr.mxu0 0.0
    %418 = vmatpush1.msra.mxu0 0.0
    %419 = vmatprep.subr.mxu0 0.0
    %420 = vmatpush1.msra.mxu0 0.0
    %421 = vmatprep.subr.mxu0 0.0
    %422 = vmatpush1.msra.mxu0 0.0
    %423 = vmatprep.subr.mxu0 0.0
    %424 = vmatpush1.msra.mxu0 0.0
    %425 = vmatprep.subr.mxu0 0.0
    %426 = vmatpush1.msra.mxu0 0.0
    %427 = vmatprep.subr.mxu0 0.0
    %428 = vmatpush1.msra.mxu0 0.0
    %429 = vmatprep.subr.mxu0 0.0
    %430 = vmatpush1.msra.mxu0 0.0
    %431 = vmatprep.subr.mxu0 0.0
    %432 = vmatpush1.msra.mxu0 0.0
    %433 = vmatprep.subr.mxu0 0.0
    %434 = vmatpush1.msra.mxu0 0.0
    %435 = vmatprep.mubr.f32.mxu0 0.0
    %436 = vmatmul.mubr.f32.gmra.mrb[0].mxu0 %v366
    %v437 = vpop.f32.mrb[0].mxu0
    %v438 = vadd.f32 0.0, %v437
    %v439 = vpop.f32.mrb[0].mxu0
    %v440 = vadd.f32 0.0, %v439
    %441 = vmatprep.mubr.f32.mxu0 0.0
    %442 = vmatmul.mubr.f32.gmra.mrb[0].mxu0 %v369
    %v443 = vpop.f32.mrb[0].mxu0
    %v444 = vadd.f32 0.0, %v443
    %v445 = vpop.f32.mrb[0].mxu0
    %v446 = vadd.f32 0.0, %v445
    %447 = vdwg.mxu0
    %v448 = vmul.f32 %v185, %v438
    %v449 = vmul.f32 %v186, %v444
    %452 = vrot.lane.b32.xlu0 %v448, 96
    %v453 = vpop.permute.xlu0 %452
    %454 = vrot.lane.b32.xlu0 %v449, 96
    %v455 = vpop.permute.xlu0 %454
    %458 = vrot.lane.b32.xlu0 %v448, 32
    %v459 = vpop.permute.xlu0 %458
    %460 = vrot.lane.b32.xlu0 %v449, 32
    %v461 = vpop.permute.xlu0 %460
    %v464 = vsel %vm198, %v453, %v448
    %v465 = vsel %vm198, %v455, %v449
    %vm466 = vcmask 523264
    %v467 = vsel %vm466, %v464, %v459
    %v468 = vsel %vm466, %v465, %v461
    %469 = vrot.lane.b32.xlu0 %v448, 64
    %v470 = vpop.permute.xlu0 %469
    %471 = vrot.lane.b32.xlu0 %v449, 64
    %v472 = vpop.permute.xlu0 %471
    %v475 = vsel %vm198, %v470, %v453
    %v476 = vsel %vm198, %v472, %v455
    %v477 = vsel %vm466, %v475, %v448
    %v478 = vsel %vm466, %v476, %v449
    %v479 = vmul.f32 %v467, %v88
    %v480 = vmul.f32 %v468, %v89
    %485 = vrot.lane.b32.xlu0 %v438, 32
    %v486 = vpop.permute.xlu0 %485
    %487 = vrot.lane.b32.xlu0 %v440, 32
    %v488 = vpop.permute.xlu0 %487
    %489 = vrot.lane.b32.xlu0 %v444, 32
    %v490 = vpop.permute.xlu0 %489
    %491 = vrot.lane.b32.xlu0 %v446, 32
    %v492 = vpop.permute.xlu0 %491
    %v493 = vsel %vm198, %v486, %v488
    %v494 = vsel %vm198, %v490, %v492
    %v497 = vmul.f32 %v477, %v493
    %v498 = vmul.f32 %v478, %v494
    %v499 = vadd.f32 %v479, %v497
    %v500 = vadd.f32 %v480, %v498
    %503 = vrot.lane.b32.xlu0 %v499, 32
    %v504 = vpop.permute.xlu0 %503
    %505 = vrot.lane.b32.xlu0 %v500, 32
    %v506 = vpop.permute.xlu0 %505
    %v509 = vsel %vm198, %v448, %v504
    %v510 = vsel %vm198, %v449, %v506
    %v512 = vsel %vm103, %v92, 0
    %514 = vmatprep.subr.mxu0 0.0
    %515 = vmatpush1.msra.mxu0 %v509
    %516 = vmatprep.subr.mxu0 0.0
    %517 = vmatpush1.msra.mxu0 %v510
    %518 = vmatprep.subr.mxu0 0.0
    %519 = vmatpush1.msra.mxu0 0.0
    %520 = vmatprep.subr.mxu0 0.0
    %521 = vmatpush1.msra.mxu0 0.0
    %522 = vmatprep.subr.mxu0 0.0
    %523 = vmatpush1.msra.mxu0 0.0
    %524 = vmatprep.subr.mxu0 0.0
    %525 = vmatpush1.msra.mxu0 0.0
    %526 = vmatprep.subr.mxu0 0.0
    %527 = vmatpush1.msra.mxu0 0.0
    %528 = vmatprep.subr.mxu0 0.0
    %529 = vmatpush1.msra.mxu0 0.0
    %530 = vmatprep.subr.mxu0 0.0
    %531 = vmatpush1.msra.mxu0 0.0
    %532 = vmatprep.subr.mxu0 0.0
    %533 = vmatpush1.msra.mxu0 0.0
    %534 = vmatprep.subr.mxu0 0.0
    %535 = vmatpush1.msra.mxu0 0.0
    %536 = vmatprep.subr.mxu0 0.0
    %537 = vmatpush1.msra.mxu0 0.0
    %538 = vmatprep.subr.mxu0 0.0
    %539 = vmatpush1.msra.mxu0 0.0
    %540 = vmatprep.subr.mxu0 0.0
    %541 = vmatpush1.msra.mxu0 0.0
    %542 = vmatprep.subr.mxu0 0.0
    %543 = vmatpush1.msra.mxu0 0.0
    %544 = vmatprep.subr.mxu0 0.0
    %545 = vmatpush1.msra.mxu0 0.0
    %546 = vmatprep.subr.mxu0 0.0
    %547 = vmatpush1.msra.mxu0 0.0
    %548 = vmatprep.subr.mxu0 0.0
    %549 = vmatpush1.msra.mxu0 0.0
    %550 = vmatprep.subr.mxu0 0.0
    %551 = vmatpush1.msra.mxu0 0.0
    %552 = vmatprep.subr.mxu0 0.0
    %553 = vmatpush1.msra.mxu0 0.0
    %554 = vmatprep.subr.mxu0 0.0
    %555 = vmatpush1.msra.mxu0 0.0
    %556 = vmatprep.subr.mxu0 0.0
    %557 = vmatpush1.msra.mxu0 0.0
    %558 = vmatprep.subr.mxu0 0.0
    %559 = vmatpush1.msra.mxu0 0.0
    %560 = vmatprep.subr.mxu0 0.0
    %561 = vmatpush1.msra.mxu0 0.0
    %562 = vmatprep.subr.mxu0 0.0
    %563 = vmatpush1.msra.mxu0 0.0
    %564 = vmatprep.subr.mxu0 0.0
    %565 = vmatpush1.msra.mxu0 0.0
    %566 = vmatprep.subr.mxu0 0.0
    %567 = vmatpush1.msra.mxu0 0.0
    %568 = vmatprep.subr.mxu0 0.0
    %569 = vmatpush1.msra.mxu0 0.0
    %570 = vmatprep.subr.mxu0 0.0
    %571 = vmatpush1.msra.mxu0 0.0
    %572 = vmatprep.subr.mxu0 0.0
    %573 = vmatpush1.msra.mxu0 0.0
    %574 = vmatprep.subr.mxu0 0.0
    %575 = vmatpush1.msra.mxu0 0.0
    %576 = vmatprep.subr.mxu0 0.0
    %577 = vmatpush1.msra.mxu0 0.0
    %578 = vmatprep.mubr.f32.mxu0 0.0
    %579 = vmatmul.mubr.f32.gmra.mrb[0].mxu0 %v512
    %v580 = vpop.f32.mrb[0].mxu0
    %v581 = vadd.f32 0.0, %v580
    %v582 = vpop.f32.mrb[0].mxu0
    %583 = vdwg.mxu0
    %v584 = vadd.f32 %v93, %v581
    %v585 = vadd.f32 %v581, 0.0
    %v586 = vld [vmem:[%s12] sm:$0xff]
    %v587 = vld [vmem:[%s12 + $0x8] sm:$0xff]
    %v588 = vld [vmem:[%s12 + $0x10] sm:$0xff]
    %v589 = vld [vmem:[%s12 + $0x18] sm:$0xff]
    %v590 = vld [vmem:[%s12 + $0x20] sm:$0xff]
    %v591 = vld [vmem:[%s12 + $0x28] sm:$0xff]
    %v592 = vld [vmem:[%s12 + $0x30] sm:$0xff]
    %v593 = vld [vmem:[%s12 + $0x38] sm:$0xff]
    %v594 = vld [vmem:[%s12 + $0x40] sm:$0xff]
    %v595 = vld [vmem:[%s12 + $0x48] sm:$0xff]
    %v596 = vld [vmem:[%s12 + $0x50] sm:$0xff]
    %v597 = vld [vmem:[%s12 + $0x58] sm:$0xff]
    %v598 = vld [vmem:[%s12 + $0x60] sm:$0xff]
    %v599 = vld [vmem:[%s12 + $0x68] sm:$0xff]
    %v600 = vld [vmem:[%s12 + $0x70] sm:$0xff]
    %v601 = vld [vmem:[%s12 + $0x78] sm:$0xff]
    %v602 = vld [vmem:[%s12 + $0x80] sm:$0xff]
    %v603 = vld [vmem:[%s12 + $0x88] sm:$0xff]
    %v604 = vld [vmem:[%s12 + $0x90] sm:$0xff]
    %v605 = vld [vmem:[%s12 + $0x98] sm:$0xff]
    %v606 = vld [vmem:[%s12 + $0xa0] sm:$0xff]
    %v607 = vld [vmem:[%s12 + $0xa8] sm:$0xff]
    %v608 = vld [vmem:[%s12 + $0xb0] sm:$0xff]
    %v609 = vld [vmem:[%s12 + $0xb8] sm:$0xff]
    %611 = vrot.lane.b32.xlu0 %v585, 96
    %v612 = vpop.permute.xlu0 %611
    %v613 = vsel %vm362, %v612, 0
    %615 = vmatprep.subr.mxu0 %v587
    %616 = vmatpush1.msra.mxu0 %v586
    %617 = vmatprep.subr.mxu0 %v589
    %618 = vmatpush1.msra.mxu0 %v588
    %619 = vmatprep.subr.mxu0 %v591
    %620 = vmatpush1.msra.mxu0 %v590
    %621 = vmatprep.subr.mxu0 %v593
    %622 = vmatpush1.msra.mxu0 %v592
    %623 = vmatprep.subr.mxu0 %v595
    %624 = vmatpush1.msra.mxu0 %v594
    %625 = vmatprep.subr.mxu0 %v597
    %626 = vmatpush1.msra.mxu0 %v596
    %627 = vmatprep.subr.mxu0 %v599
    %628 = vmatpush1.msra.mxu0 %v598
    %629 = vmatprep.subr.mxu0 %v601
    %630 = vmatpush1.msra.mxu0 %v600
    %631 = vmatprep.subr.mxu0 %v603
    %632 = vmatpush1.msra.mxu0 %v602
    %633 = vmatprep.subr.mxu0 %v605
    %634 = vmatpush1.msra.mxu0 %v604
    %635 = vmatprep.subr.mxu0 %v607
    %636 = vmatpush1.msra.mxu0 %v606
    %637 = vmatprep.subr.mxu0 %v609
    %638 = vmatpush1.msra.mxu0 %v608
    %639 = vmatprep.subr.mxu0 0.0
    %640 = vmatpush1.msra.mxu0 0.0
    %641 = vmatprep.subr.mxu0 0.0
    %642 = vmatpush1.msra.mxu0 0.0
    %643 = vmatprep.subr.mxu0 0.0
    %644 = vmatpush1.msra.mxu0 0.0
    %645 = vmatprep.subr.mxu0 0.0
    %646 = vmatpush1.msra.mxu0 0.0
    %647 = vmatprep.subr.mxu0 0.0
    %648 = vmatpush1.msra.mxu0 0.0
    %649 = vmatprep.subr.mxu0 0.0
    %650 = vmatpush1.msra.mxu0 0.0
    %651 = vmatprep.subr.mxu0 0.0
    %652 = vmatpush1.msra.mxu0 0.0
    %653 = vmatprep.subr.mxu0 0.0
    %654 = vmatpush1.msra.mxu0 0.0
    %655 = vmatprep.subr.mxu0 0.0
    %656 = vmatpush1.msra.mxu0 0.0
    %657 = vmatprep.subr.mxu0 0.0
    %658 = vmatpush1.msra.mxu0 0.0
    %659 = vmatprep.subr.mxu0 0.0
    %660 = vmatpush1.msra.mxu0 0.0
    %661 = vmatprep.subr.mxu0 0.0
    %662 = vmatpush1.msra.mxu0 0.0
    %663 = vmatprep.subr.mxu0 0.0
    %664 = vmatpush1.msra.mxu0 0.0
    %665 = vmatprep.subr.mxu0 0.0
    %666 = vmatpush1.msra.mxu0 0.0
    %667 = vmatprep.subr.mxu0 0.0
    %668 = vmatpush1.msra.mxu0 0.0
    %669 = vmatprep.subr.mxu0 0.0
    %670 = vmatpush1.msra.mxu0 0.0
    %671 = vmatprep.subr.mxu0 0.0
    %672 = vmatpush1.msra.mxu0 0.0
    %673 = vmatprep.subr.mxu0 0.0
    %674 = vmatpush1.msra.mxu0 0.0
    %675 = vmatprep.subr.mxu0 0.0
    %676 = vmatpush1.msra.mxu0 0.0
    %677 = vmatprep.subr.mxu0 0.0
    %678 = vmatpush1.msra.mxu0 0.0
    %679 = vmatprep.mubr.f32.mxu0 0.0
    %680 = vmatmul.mubr.f32.gmra.mrb[0].mxu0 %v613
    %v681 = vpop.f32.mrb[0].mxu0
    %v682 = vadd.f32 0.0, %v681
    %v683 = vpop.f32.mrb[0].mxu0
    %v684 = vadd.f32 0.0, %v683
    %685 = vdwg.mxu0
    %v686 = vmul.f32 %v682, %v682
    %688 = vrot.lane.b32.xlu0 %v686, 96
    %v689 = vpop.permute.xlu0 %688
    %v691 = vadd.f32 %v686, %v689
    %692 = vrot.lane.b32.xlu0 %v686, 64
    %v693 = vpop.permute.xlu0 %692
    %v695 = vadd.f32 %v691, %v693
    %v696 = vadd.f32 %v695, 1e-08
    %v697 = vrsqrt.pop %v696
    %v698 = vmul.f32 %v696, %v697
    %vm699 = vcmp.eq.f32.partialorder %v696, inf
    %v700 = vsel %vm699, %v696, %v698
    %vm701 = vcmp.eq.f32.partialorder %v696, 0.0
    %v702 = vand.u32 %v696, 2147483648
    %v703 = vsel %vm701, %v702, %v700
    %706 = vrot.lane.b32.xlu0 %v682, 32
    %v707 = vpop.permute.xlu0 %706
    %708 = vrot.lane.b32.xlu0 %v684, 32
    %v709 = vpop.permute.xlu0 %708
    %v710 = vsel %vm198, %v707, %v709
    %v712 = vmul.f32 %v682, %v710
    %714 = vrot.lane.b32.xlu0 %v712, 96
    %v715 = vpop.permute.xlu0 %714
    %v717 = vadd.f32 %v712, %v715
    %718 = vrot.lane.b32.xlu0 %v712, 64
    %v719 = vpop.permute.xlu0 %718
    %v721 = vadd.f32 %v717, %v719
    %723 = vrot.lane.b32.xlu0 %v703, 32
    %v724 = vpop.permute.xlu0 %723
    %v726 = vsel %vm198, %v584, %v724
    %v727 = vld [vmem:[%s13] sm:$0xff]
    %v728 = vld [vmem:[%s13 + $0x8] sm:$0xff]
    %v729 = vld [vmem:[%s13 + $0x10] sm:$0xff]
    %v730 = vld [vmem:[%s13 + $0x18] sm:$0xff]
    %v731 = vld [vmem:[%s13 + $0x20] sm:$0xff]
    %v732 = vld [vmem:[%s13 + $0x28] sm:$0xff]
    %v733 = vld [vmem:[%s13 + $0x30] sm:$0xff]
    %v734 = vld [vmem:[%s13 + $0x38] sm:$0xff]
    %v735 = vld [vmem:[%s14] sm:$0x1]
    %v737 = vlaneseq
    %v738 = vshrl.u32 %v737, 7
    %v739 = vsub.s32 0, %v738
    %v740 = vrot.slane %v735, %v739
    %v743 = vsel %vm466, %v726, 0
    %745 = vmatprep.subr.mxu0 0.0
    %746 = vmatpush1.msra.mxu0 %v727
    %747 = vmatprep.subr.mxu0 0.0
    %748 = vmatpush1.msra.mxu0 %v728
    %749 = vmatprep.subr.mxu0 0.0
    %750 = vmatpush1.msra.mxu0 %v729
    %751 = vmatprep.subr.mxu0 0.0
    %752 = vmatpush1.msra.mxu0 %v730
    %753 = vmatprep.subr.mxu0 0.0
    %754 = vmatpush1.msra.mxu0 %v731
    %755 = vmatprep.subr.mxu0 0.0
    %756 = vmatpush1.msra.mxu0 %v732
    %757 = vmatprep.subr.mxu0 0.0
    %758 = vmatpush1.msra.mxu0 %v733
    %759 = vmatprep.subr.mxu0 0.0
    %760 = vmatpush1.msra.mxu0 %v734
    %761 = vmatprep.subr.mxu0 0.0
    %762 = vmatpush1.msra.mxu0 0.0
    %763 = vmatprep.subr.mxu0 0.0
    %764 = vmatpush1.msra.mxu0 0.0
    %765 = vmatprep.subr.mxu0 0.0
    %766 = vmatpush1.msra.mxu0 0.0
    %767 = vmatprep.subr.mxu0 0.0
    %768 = vmatpush1.msra.mxu0 0.0
    %769 = vmatprep.subr.mxu0 0.0
    %770 = vmatpush1.msra.mxu0 0.0
    %771 = vmatprep.subr.mxu0 0.0
    %772 = vmatpush1.msra.mxu0 0.0
    %773 = vmatprep.subr.mxu0 0.0
    %774 = vmatpush1.msra.mxu0 0.0
    %775 = vmatprep.subr.mxu0 0.0
    %776 = vmatpush1.msra.mxu0 0.0
    %777 = vmatprep.subr.mxu0 0.0
    %778 = vmatpush1.msra.mxu0 0.0
    %779 = vmatprep.subr.mxu0 0.0
    %780 = vmatpush1.msra.mxu0 0.0
    %781 = vmatprep.subr.mxu0 0.0
    %782 = vmatpush1.msra.mxu0 0.0
    %783 = vmatprep.subr.mxu0 0.0
    %784 = vmatpush1.msra.mxu0 0.0
    %785 = vmatprep.subr.mxu0 0.0
    %786 = vmatpush1.msra.mxu0 0.0
    %787 = vmatprep.subr.mxu0 0.0
    %788 = vmatpush1.msra.mxu0 0.0
    %789 = vmatprep.subr.mxu0 0.0
    %790 = vmatpush1.msra.mxu0 0.0
    %791 = vmatprep.subr.mxu0 0.0
    %792 = vmatpush1.msra.mxu0 0.0
    %793 = vmatprep.subr.mxu0 0.0
    %794 = vmatpush1.msra.mxu0 0.0
    %795 = vmatprep.subr.mxu0 0.0
    %796 = vmatpush1.msra.mxu0 0.0
    %797 = vmatprep.subr.mxu0 0.0
    %798 = vmatpush1.msra.mxu0 0.0
    %799 = vmatprep.subr.mxu0 0.0
    %800 = vmatpush1.msra.mxu0 0.0
    %801 = vmatprep.subr.mxu0 0.0
    %802 = vmatpush1.msra.mxu0 0.0
    %803 = vmatprep.subr.mxu0 0.0
    %804 = vmatpush1.msra.mxu0 0.0
    %805 = vmatprep.subr.mxu0 0.0
    %806 = vmatpush1.msra.mxu0 0.0
    %807 = vmatprep.subr.mxu0 0.0
    %808 = vmatpush1.msra.mxu0 0.0
    %809 = vmatprep.mubr.f32.mxu0 0.0
    %810 = vmatmul.mubr.f32.gmra.mrb[0].mxu0 %v743
    %v811 = vpop.f32.mrb[0].mxu0
    %v812 = vadd.f32 %v740, %v811
    %v813 = vpop.f32.mrb[0].mxu0
    %814 = vdwg.mxu0
    %v815 = vsub.f32 0.0, %v812
    %v816 = vmul.f32 %v815, 1.442695
    %v817 = vpow.pop %v816
    %v818 = vadd.f32 %v817, 1.0
    %v819 = vrcp.pop %v818
    %v820 = vmul.f32 %v812, %v819
    %v821 = vld [vmem:[%s15] sm:$0xff]
    %v822 = vld [vmem:[%s15 + $0x8] sm:$0xff]
    %v823 = vld [vmem:[%s15 + $0x10] sm:$0xff]
    %v824 = vld [vmem:[%s15 + $0x18] sm:$0xff]
    %v825 = vld [vmem:[%s16] sm:$0x1]
    %v827 = vlaneseq
    %v828 = vshrl.u32 %v827, 7
    %v829 = vsub.s32 0, %v828
    %v830 = vrot.slane %v825, %v829
    %v833 = vsel %vm198, %v820, 0
    %835 = vmatprep.subr.mxu0 0.0
    %836 = vmatpush1.msra.mxu0 %v821
    %837 = vmatprep.subr.mxu0 0.0
    %838 = vmatpush1.msra.mxu0 %v822
    %839 = vmatprep.subr.mxu0 0.0
    %840 = vmatpush1.msra.mxu0 %v823
    %841 = vmatprep.subr.mxu0 0.0
    %842 = vmatpush1.msra.mxu0 %v824
    %843 = vmatprep.subr.mxu0 0.0
    %844 = vmatpush1.msra.mxu0 0.0
    %845 = vmatprep.subr.mxu0 0.0
    %846 = vmatpush1.msra.mxu0 0.0
    %847 = vmatprep.subr.mxu0 0.0
    %848 = vmatpush1.msra.mxu0 0.0
    %849 = vmatprep.subr.mxu0 0.0
    %850 = vmatpush1.msra.mxu0 0.0
    %851 = vmatprep.subr.mxu0 0.0
    %852 = vmatpush1.msra.mxu0 0.0
    %853 = vmatprep.subr.mxu0 0.0
    %854 = vmatpush1.msra.mxu0 0.0
    %855 = vmatprep.subr.mxu0 0.0
    %856 = vmatpush1.msra.mxu0 0.0
    %857 = vmatprep.subr.mxu0 0.0
    %858 = vmatpush1.msra.mxu0 0.0
    %859 = vmatprep.subr.mxu0 0.0
    %860 = vmatpush1.msra.mxu0 0.0
    %861 = vmatprep.subr.mxu0 0.0
    %862 = vmatpush1.msra.mxu0 0.0
    %863 = vmatprep.subr.mxu0 0.0
    %864 = vmatpush1.msra.mxu0 0.0
    %865 = vmatprep.subr.mxu0 0.0
    %866 = vmatpush1.msra.mxu0 0.0
    %867 = vmatprep.subr.mxu0 0.0
    %868 = vmatpush1.msra.mxu0 0.0
    %869 = vmatprep.subr.mxu0 0.0
    %870 = vmatpush1.msra.mxu0 0.0
    %871 = vmatprep.subr.mxu0 0.0
    %872 = vmatpush1.msra.mxu0 0.0
    %873 = vmatprep.subr.mxu0 0.0
    %874 = vmatpush1.msra.mxu0 0.0
    %875 = vmatprep.subr.mxu0 0.0
    %876 = vmatpush1.msra.mxu0 0.0
    %877 = vmatprep.subr.mxu0 0.0
    %878 = vmatpush1.msra.mxu0 0.0
    %879 = vmatprep.subr.mxu0 0.0
    %880 = vmatpush1.msra.mxu0 0.0
    %881 = vmatprep.subr.mxu0 0.0
    %882 = vmatpush1.msra.mxu0 0.0
    %883 = vmatprep.subr.mxu0 0.0
    %884 = vmatpush1.msra.mxu0 0.0
    %885 = vmatprep.subr.mxu0 0.0
    %886 = vmatpush1.msra.mxu0 0.0
    %887 = vmatprep.subr.mxu0 0.0
    %888 = vmatpush1.msra.mxu0 0.0
    %889 = vmatprep.subr.mxu0 0.0
    %890 = vmatpush1.msra.mxu0 0.0
    %891 = vmatprep.subr.mxu0 0.0
    %892 = vmatpush1.msra.mxu0 0.0
    %893 = vmatprep.subr.mxu0 0.0
    %894 = vmatpush1.msra.mxu0 0.0
    %895 = vmatprep.subr.mxu0 0.0
    %896 = vmatpush1.msra.mxu0 0.0
    %897 = vmatprep.subr.mxu0 0.0
    %898 = vmatpush1.msra.mxu0 0.0
    %899 = vmatprep.mubr.f32.mxu0 0.0
    %900 = vmatmul.mubr.f32.gmra.mrb[0].mxu0 %v833
    %v901 = vpop.f32.mrb[0].mxu0
    %v902 = vadd.f32 %v830, %v901
    %v903 = vpop.f32.mrb[0].mxu0
    %904 = vdwg.mxu0
    %906 = vrot.lane.b32.xlu0 %v902, 96
    %v907 = vpop.permute.xlu0 %906
    %909 = vrot.lane.b32.xlu0 %v902, 32
    %v910 = vpop.permute.xlu0 %909
    %v912 = vsel %vm198, %v907, %v902
    %v913 = vsel %vm466, %v912, %v910
    %v914 = vadd.f32 %v584, %v902
    %916 = vrot.lane.b32.xlu0 %v721, 64
    %v917 = vpop.permute.xlu0 %916
    %v919 = vmul.f32 %v902, %v917
    %921 = vrot.lane.b32.xlu0 %v919, 64
    %v922 = vpop.permute.xlu0 %921
    %v924 = vadd.f32 %v914, %v922
    %v925 = vmul.f32 %v913, %v710
    %927 = vrot.lane.b32.xlu0 %v925, 32
    %v928 = vpop.permute.xlu0 %927
    %v930 = vadd.f32 %v585, %v928
    %s931 = scalar_lea.vmem %s6, 16
    %v932 = vld [vmem:[%s931] sm:$0xff]
    %v933 = vld [vmem:[%s931 + $0x8] sm:$0xff]
    %s934 = scalar_lea.vmem %s7, 1
    %v935 = vld [vmem:[%s934] sm:$0x1]
    %v937 = vlaneseq
    %v938 = vshrl.u32 %v937, 7
    %v939 = vsub.s32 0, %v938
    %v940 = vrot.slane %v935, %v939
    %942 = vmatprep.subr.mxu0 0.0
    %943 = vmatpush1.msra.mxu0 %v932
    %944 = vmatprep.subr.mxu0 0.0
    %945 = vmatpush1.msra.mxu0 %v933
    %946 = vmatprep.subr.mxu0 0.0
    %947 = vmatpush1.msra.mxu0 0.0
    %948 = vmatprep.subr.mxu0 0.0
    %949 = vmatpush1.msra.mxu0 0.0
    %950 = vmatprep.subr.mxu0 0.0
    %951 = vmatpush1.msra.mxu0 0.0
    %952 = vmatprep.subr.mxu0 0.0
    %953 = vmatpush1.msra.mxu0 0.0
    %954 = vmatprep.subr.mxu0 0.0
    %955 = vmatpush1.msra.mxu0 0.0
    %956 = vmatprep.subr.mxu0 0.0
    %957 = vmatpush1.msra.mxu0 0.0
    %958 = vmatprep.subr.mxu0 0.0
    %959 = vmatpush1.msra.mxu0 0.0
    %960 = vmatprep.subr.mxu0 0.0
    %961 = vmatpush1.msra.mxu0 0.0
    %962 = vmatprep.subr.mxu0 0.0
    %963 = vmatpush1.msra.mxu0 0.0
    %964 = vmatprep.subr.mxu0 0.0
    %965 = vmatpush1.msra.mxu0 0.0
    %966 = vmatprep.subr.mxu0 0.0
    %967 = vmatpush1.msra.mxu0 0.0
    %968 = vmatprep.subr.mxu0 0.0
    %969 = vmatpush1.msra.mxu0 0.0
    %970 = vmatprep.subr.mxu0 0.0
    %971 = vmatpush1.msra.mxu0 0.0
    %972 = vmatprep.subr.mxu0 0.0
    %973 = vmatpush1.msra.mxu0 0.0
    %974 = vmatprep.subr.mxu0 0.0
    %975 = vmatpush1.msra.mxu0 0.0
    %976 = vmatprep.subr.mxu0 0.0
    %977 = vmatpush1.msra.mxu0 0.0
    %978 = vmatprep.subr.mxu0 0.0
    %979 = vmatpush1.msra.mxu0 0.0
    %980 = vmatprep.subr.mxu0 0.0
    %981 = vmatpush1.msra.mxu0 0.0
    %982 = vmatprep.subr.mxu0 0.0
    %983 = vmatpush1.msra.mxu0 0.0
    %984 = vmatprep.subr.mxu0 0.0
    %985 = vmatpush1.msra.mxu0 0.0
    %986 = vmatprep.subr.mxu0 0.0
    %987 = vmatpush1.msra.mxu0 0.0
    %988 = vmatprep.subr.mxu0 0.0
    %989 = vmatpush1.msra.mxu0 0.0
    %990 = vmatprep.subr.mxu0 0.0
    %991 = vmatpush1.msra.mxu0 0.0
    %992 = vmatprep.subr.mxu0 0.0
    %993 = vmatpush1.msra.mxu0 0.0
    %994 = vmatprep.subr.mxu0 0.0
    %995 = vmatpush1.msra.mxu0 0.0
    %996 = vmatprep.subr.mxu0 0.0
    %997 = vmatpush1.msra.mxu0 0.0
    %998 = vmatprep.subr.mxu0 0.0
    %999 = vmatpush1.msra.mxu0 0.0
    %1000 = vmatprep.subr.mxu0 0.0
    %1001 = vmatpush1.msra.mxu0 0.0
    %1002 = vmatprep.subr.mxu0 0.0
    %1003 = vmatpush1.msra.mxu0 0.0
    %1004 = vmatprep.subr.mxu0 0.0
    %1005 = vmatpush1.msra.mxu0 0.0
    %1006 = vmatprep.mubr.f32.mxu0 0.0
    %1007 = vmatmul.mubr.f32.gmra.mrb[0].mxu0 %v105
    %v1008 = vpop.f32.mrb[0].mxu0
    %v1009 = vadd.f32 %v940, %v1008
    %v1010 = vpop.f32.mrb[0].mxu0
    %1011 = vmatprep.mubr.f32.mxu0 0.0
    %1012 = vmatmul.mubr.f32.gmra.mrb[0].mxu0 %v108
    %v1013 = vpop.f32.mrb[0].mxu0
    %v1014 = vadd.f32 %v940, %v1013
    %v1015 = vpop.f32.mrb[0].mxu0
    %1016 = vdwg.mxu0
    %v1017 = vmul.f32 %v1009, %v81
    %v1018 = vmul.f32 %v1014, %v86
    %s1019 = scalar_lea.vmem %s8, 32
    %v1020 = vld [vmem:[%s1019] sm:$0xff]
    %v1021 = vld [vmem:[%s1019 + $0x8] sm:$0xff]
    %v1022 = vld [vmem:[%s1019 + $0x10] sm:$0xff]
    %v1023 = vld [vmem:[%s1019 + $0x18] sm:$0xff]
    %s1024 = scalar_lea.vmem %s9, 1
    %v1025 = vld [vmem:[%s1024] sm:$0x1]
    %v1027 = vlaneseq
    %v1028 = vshrl.u32 %v1027, 7
    %v1029 = vsub.s32 0, %v1028
    %v1030 = vrot.slane %v1025, %v1029
    %v1033 = vsel %vm198, %v924, 0
    %1035 = vmatprep.subr.mxu0 0.0
    %1036 = vmatpush1.msra.mxu0 %v1020
    %1037 = vmatprep.subr.mxu0 0.0
    %1038 = vmatpush1.msra.mxu0 %v1021
    %1039 = vmatprep.subr.mxu0 0.0
    %1040 = vmatpush1.msra.mxu0 %v1022
    %1041 = vmatprep.subr.mxu0 0.0
    %1042 = vmatpush1.msra.mxu0 %v1023
    %1043 = vmatprep.subr.mxu0 0.0
    %1044 = vmatpush1.msra.mxu0 0.0
    %1045 = vmatprep.subr.mxu0 0.0
    %1046 = vmatpush1.msra.mxu0 0.0
    %1047 = vmatprep.subr.mxu0 0.0
    %1048 = vmatpush1.msra.mxu0 0.0
    %1049 = vmatprep.subr.mxu0 0.0
    %1050 = vmatpush1.msra.mxu0 0.0
    %1051 = vmatprep.subr.mxu0 0.0
    %1052 = vmatpush1.msra.mxu0 0.0
    %1053 = vmatprep.subr.mxu0 0.0
    %1054 = vmatpush1.msra.mxu0 0.0
    %1055 = vmatprep.subr.mxu0 0.0
    %1056 = vmatpush1.msra.mxu0 0.0
    %1057 = vmatprep.subr.mxu0 0.0
    %1058 = vmatpush1.msra.mxu0 0.0
    %1059 = vmatprep.subr.mxu0 0.0
    %1060 = vmatpush1.msra.mxu0 0.0
    %1061 = vmatprep.subr.mxu0 0.0
    %1062 = vmatpush1.msra.mxu0 0.0
    %1063 = vmatprep.subr.mxu0 0.0
    %1064 = vmatpush1.msra.mxu0 0.0
    %1065 = vmatprep.subr.mxu0 0.0
    %1066 = vmatpush1.msra.mxu0 0.0
    %1067 = vmatprep.subr.mxu0 0.0
    %1068 = vmatpush1.msra.mxu0 0.0
    %1069 = vmatprep.subr.mxu0 0.0
    %1070 = vmatpush1.msra.mxu0 0.0
    %1071 = vmatprep.subr.mxu0 0.0
    %1072 = vmatpush1.msra.mxu0 0.0
    %1073 = vmatprep.subr.mxu0 0.0
    %1074 = vmatpush1.msra.mxu0 0.0
    %1075 = vmatprep.subr.mxu0 0.0
    %1076 = vmatpush1.msra.mxu0 0.0
    %1077 = vmatprep.subr.mxu0 0.0
    %1078 = vmatpush1.msra.mxu0 0.0
    %1079 = vmatprep.subr.mxu0 0.0
    %1080 = vmatpush1.msra.mxu0 0.0
    %1081 = vmatprep.subr.mxu0 0.0
    %1082 = vmatpush1.msra.mxu0 0.0
    %1083 = vmatprep.subr.mxu0 0.0
    %1084 = vmatpush1.msra.mxu0 0.0
    %1085 = vmatprep.subr.mxu0 0.0
    %1086 = vmatpush1.msra.mxu0 0.0
    %1087 = vmatprep.subr.mxu0 0.0
    %1088 = vmatpush1.msra.mxu0 0.0
    %1089 = vmatprep.subr.mxu0 0.0
    %1090 = vmatpush1.msra.mxu0 0.0
    %1091 = vmatprep.subr.mxu0 0.0
    %1092 = vmatpush1.msra.mxu0 0.0
    %1093 = vmatprep.subr.mxu0 0.0
    %1094 = vmatpush1.msra.mxu0 0.0
    %1095 = vmatprep.subr.mxu0 0.0
    %1096 = vmatpush1.msra.mxu0 0.0
    %1097 = vmatprep.subr.mxu0 0.0
    %1098 = vmatpush1.msra.mxu0 0.0
    %1099 = vmatprep.mubr.f32.mxu0 0.0
    %1100 = vmatmul.mubr.f32.gmra.mrb[0].mxu0 %v1033
    %v1101 = vpop.f32.mrb[0].mxu0
    %v1102 = vadd.f32 %v1030, %v1101
    %v1103 = vpop.f32.mrb[0].mxu0
    %1104 = vdwg.mxu0
    %v1105 = vsub.f32 0.0, %v1102
    %v1106 = vmul.f32 %v1105, 1.442695
    %v1107 = vpow.pop %v1106
    %v1108 = vadd.f32 %v1107, 1.0
    %v1109 = vrcp.pop %v1108
    %v1110 = vmul.f32 %v1102, %v1109
    %s1111 = scalar_lea.vmem %s10, 32
    %v1112 = vld [vmem:[%s1111] sm:$0xff]
    %v1113 = vld [vmem:[%s1111 + $0x8] sm:$0xff]
    %v1114 = vld [vmem:[%s1111 + $0x10] sm:$0xff]
    %v1115 = vld [vmem:[%s1111 + $0x18] sm:$0xff]
    %s1116 = scalar_lea.vmem %s11, 1
    %v1117 = vld [vmem:[%s1116] sm:$0x1]
    %v1119 = vlaneseq
    %v1120 = vshrl.u32 %v1119, 7
    %v1121 = vsub.s32 0, %v1120
    %v1122 = vrot.slane %v1117, %v1121
    %v1125 = vsel %vm198, %v1110, 0
    %1127 = vmatprep.subr.mxu0 0.0
    %1128 = vmatpush1.msra.mxu0 %v1112
    %1129 = vmatprep.subr.mxu0 0.0
    %1130 = vmatpush1.msra.mxu0 %v1113
    %1131 = vmatprep.subr.mxu0 0.0
    %1132 = vmatpush1.msra.mxu0 %v1114
    %1133 = vmatprep.subr.mxu0 0.0
    %1134 = vmatpush1.msra.mxu0 %v1115
    %1135 = vmatprep.subr.mxu0 0.0
    %1136 = vmatpush1.msra.mxu0 0.0
    %1137 = vmatprep.subr.mxu0 0.0
    %1138 = vmatpush1.msra.mxu0 0.0
    %1139 = vmatprep.subr.mxu0 0.0
    %1140 = vmatpush1.msra.mxu0 0.0
    %1141 = vmatprep.subr.mxu0 0.0
    %1142 = vmatpush1.msra.mxu0 0.0
    %1143 = vmatprep.subr.mxu0 0.0
    %1144 = vmatpush1.msra.mxu0 0.0
    %1145 = vmatprep.subr.mxu0 0.0
    %1146 = vmatpush1.msra.mxu0 0.0
    %1147 = vmatprep.subr.mxu0 0.0
    %1148 = vmatpush1.msra.mxu0 0.0
    %1149 = vmatprep.subr.mxu0 0.0
    %1150 = vmatpush1.msra.mxu0 0.0
    %1151 = vmatprep.subr.mxu0 0.0
    %1152 = vmatpush1.msra.mxu0 0.0
    %1153 = vmatprep.subr.mxu0 0.0
    %1154 = vmatpush1.msra.mxu0 0.0
    %1155 = vmatprep.subr.mxu0 0.0
    %1156 = vmatpush1.msra.mxu0 0.0
    %1157 = vmatprep.subr.mxu0 0.0
    %1158 = vmatpush1.msra.mxu0 0.0
    %1159 = vmatprep.subr.mxu0 0.0
    %1160 = vmatpush1.msra.mxu0 0.0
    %1161 = vmatprep.subr.mxu0 0.0
    %1162 = vmatpush1.msra.mxu0 0.0
    %1163 = vmatprep.subr.mxu0 0.0
    %1164 = vmatpush1.msra.mxu0 0.0
    %1165 = vmatprep.subr.mxu0 0.0
    %1166 = vmatpush1.msra.mxu0 0.0
    %1167 = vmatprep.subr.mxu0 0.0
    %1168 = vmatpush1.msra.mxu0 0.0
    %1169 = vmatprep.subr.mxu0 0.0
    %1170 = vmatpush1.msra.mxu0 0.0
    %1171 = vmatprep.subr.mxu0 0.0
    %1172 = vmatpush1.msra.mxu0 0.0
    %1173 = vmatprep.subr.mxu0 0.0
    %1174 = vmatpush1.msra.mxu0 0.0
    %1175 = vmatprep.subr.mxu0 0.0
    %1176 = vmatpush1.msra.mxu0 0.0
    %1177 = vmatprep.subr.mxu0 0.0
    %1178 = vmatpush1.msra.mxu0 0.0
    %1179 = vmatprep.subr.mxu0 0.0
    %1180 = vmatpush1.msra.mxu0 0.0
    %1181 = vmatprep.subr.mxu0 0.0
    %1182 = vmatpush1.msra.mxu0 0.0
    %1183 = vmatprep.subr.mxu0 0.0
    %1184 = vmatpush1.msra.mxu0 0.0
    %1185 = vmatprep.subr.mxu0 0.0
    %1186 = vmatpush1.msra.mxu0 0.0
    %1187 = vmatprep.subr.mxu0 0.0
    %1188 = vmatpush1.msra.mxu0 0.0
    %1189 = vmatprep.subr.mxu0 0.0
    %1190 = vmatpush1.msra.mxu0 0.0
    %1191 = vmatprep.mubr.f32.mxu0 0.0
    %1192 = vmatmul.mubr.f32.gmra.mrb[0].mxu0 %v1125
    %v1193 = vpop.f32.mrb[0].mxu0
    %v1194 = vadd.f32 %v1122, %v1193
    %v1195 = vpop.f32.mrb[0].mxu0
    %1196 = vdwg.mxu0
    %1198 = vrot.lane.b32.xlu0 %v930, 64
    %v1199 = vpop.permute.xlu0 %1198
    %v1201 = vsel %vm362, %v1194, %v1199
    %1202 = vmatprep.subr.mxu0 %v1199
    %1203 = vmatpush1.msra.mxu0 %v1201
    %1204 = vmatprep.subr.mxu0 0.0
    %1205 = vmatpush1.msra.mxu0 0.0
    %1206 = vmatprep.subr.mxu0 0.0
    %1207 = vmatpush1.msra.mxu0 0.0
    %1208 = vmatprep.subr.mxu0 0.0
    %1209 = vmatpush1.msra.mxu0 0.0
    %1210 = vmatprep.subr.mxu0 0.0
    %1211 = vmatpush1.msra.mxu0 0.0
    %1212 = vmatprep.subr.mxu0 0.0
    %1213 = vmatpush1.msra.mxu0 0.0
    %1214 = vmatprep.subr.mxu0 0.0
    %1215 = vmatpush1.msra.mxu0 0.0
    %1216 = vmatprep.subr.mxu0 0.0
    %1217 = vmatpush1.msra.mxu0 0.0
    %1218 = vmatprep.subr.mxu0 0.0
    %1219 = vmatpush1.msra.mxu0 0.0
    %1220 = vmatprep.subr.mxu0 0.0
    %1221 = vmatpush1.msra.mxu0 0.0
    %1222 = vmatprep.subr.mxu0 0.0
    %1223 = vmatpush1.msra.mxu0 0.0
    %1224 = vmatprep.subr.mxu0 0.0
    %1225 = vmatpush1.msra.mxu0 0.0
    %1226 = vmatprep.subr.mxu0 0.0
    %1227 = vmatpush1.msra.mxu0 0.0
    %1228 = vmatprep.subr.mxu0 0.0
    %1229 = vmatpush1.msra.mxu0 0.0
    %1230 = vmatprep.subr.mxu0 0.0
    %1231 = vmatpush1.msra.mxu0 0.0
    %1232 = vmatprep.subr.mxu0 0.0
    %1233 = vmatpush1.msra.mxu0 0.0
    %1234 = vmatprep.subr.mxu0 0.0
    %1235 = vmatpush1.msra.mxu0 0.0
    %1236 = vmatprep.subr.mxu0 0.0
    %1237 = vmatpush1.msra.mxu0 0.0
    %1238 = vmatprep.subr.mxu0 0.0
    %1239 = vmatpush1.msra.mxu0 0.0
    %1240 = vmatprep.subr.mxu0 0.0
    %1241 = vmatpush1.msra.mxu0 0.0
    %1242 = vmatprep.subr.mxu0 0.0
    %1243 = vmatpush1.msra.mxu0 0.0
    %1244 = vmatprep.subr.mxu0 0.0
    %1245 = vmatpush1.msra.mxu0 0.0
    %1246 = vmatprep.subr.mxu0 0.0
    %1247 = vmatpush1.msra.mxu0 0.0
    %1248 = vmatprep.subr.mxu0 0.0
    %1249 = vmatpush1.msra.mxu0 0.0
    %1250 = vmatprep.subr.mxu0 0.0
    %1251 = vmatpush1.msra.mxu0 0.0
    %1252 = vmatprep.subr.mxu0 0.0
    %1253 = vmatpush1.msra.mxu0 0.0
    %1254 = vmatprep.subr.mxu0 0.0
    %1255 = vmatpush1.msra.mxu0 0.0
    %1256 = vmatprep.subr.mxu0 0.0
    %1257 = vmatpush1.msra.mxu0 0.0
    %1258 = vmatprep.subr.mxu0 0.0
    %1259 = vmatpush1.msra.mxu0 0.0
    %1260 = vmatprep.subr.mxu0 0.0
    %1261 = vmatpush1.msra.mxu0 0.0
    %1262 = vmatprep.subr.mxu0 0.0
    %1263 = vmatpush1.msra.mxu0 0.0
    %1264 = vmatprep.subr.mxu0 0.0
    %1265 = vmatpush1.msra.mxu0 0.0
    %1266 = vmatprep.mubr.f32.mxu0 0.0
    %1267 = vmatmul.mubr.f32.gmra.mrb[0].mxu0 %v366
    %v1268 = vpop.f32.mrb[0].mxu0
    %v1269 = vadd.f32 0.0, %v1268
    %v1270 = vpop.f32.mrb[0].mxu0
    %v1271 = vadd.f32 0.0, %v1270
    %1272 = vmatprep.mubr.f32.mxu0 0.0
    %1273 = vmatmul.mubr.f32.gmra.mrb[0].mxu0 %v369
    %v1274 = vpop.f32.mrb[0].mxu0
    %v1275 = vadd.f32 0.0, %v1274
    %v1276 = vpop.f32.mrb[0].mxu0
    %v1277 = vadd.f32 0.0, %v1276
    %1278 = vdwg.mxu0
    %v1279 = vmul.f32 %v1017, %v1269
    %v1280 = vmul.f32 %v1018, %v1275
    %1283 = vrot.lane.b32.xlu0 %v1279, 96
    %v1284 = vpop.permute.xlu0 %1283
    %1285 = vrot.lane.b32.xlu0 %v1280, 96
    %v1286 = vpop.permute.xlu0 %1285
    %1289 = vrot.lane.b32.xlu0 %v1279, 32
    %v1290 = vpop.permute.xlu0 %1289
    %1291 = vrot.lane.b32.xlu0 %v1280, 32
    %v1292 = vpop.permute.xlu0 %1291
    %v1295 = vsel %vm198, %v1284, %v1279
    %v1296 = vsel %vm198, %v1286, %v1280
    %v1297 = vsel %vm466, %v1295, %v1290
    %v1298 = vsel %vm466, %v1296, %v1292
    %1299 = vrot.lane.b32.xlu0 %v1279, 64
    %v1300 = vpop.permute.xlu0 %1299
    %1301 = vrot.lane.b32.xlu0 %v1280, 64
    %v1302 = vpop.permute.xlu0 %1301
    %v1305 = vsel %vm198, %v1300, %v1284
    %v1306 = vsel %vm198, %v1302, %v1286
    %v1307 = vsel %vm466, %v1305, %v1279
    %v1308 = vsel %vm466, %v1306, %v1280
    %v1309 = vmul.f32 %v1297, %v88
    %v1310 = vmul.f32 %v1298, %v89
    %1315 = vrot.lane.b32.xlu0 %v1269, 32
    %v1316 = vpop.permute.xlu0 %1315
    %1317 = vrot.lane.b32.xlu0 %v1271, 32
    %v1318 = vpop.permute.xlu0 %1317
    %1319 = vrot.lane.b32.xlu0 %v1275, 32
    %v1320 = vpop.permute.xlu0 %1319
    %1321 = vrot.lane.b32.xlu0 %v1277, 32
    %v1322 = vpop.permute.xlu0 %1321
    %v1323 = vsel %vm198, %v1316, %v1318
    %v1324 = vsel %vm198, %v1320, %v1322
    %v1327 = vmul.f32 %v1307, %v1323
    %v1328 = vmul.f32 %v1308, %v1324
    %v1329 = vadd.f32 %v1309, %v1327
    %v1330 = vadd.f32 %v1310, %v1328
    %1333 = vrot.lane.b32.xlu0 %v1329, 32
    %v1334 = vpop.permute.xlu0 %1333
    %1335 = vrot.lane.b32.xlu0 %v1330, 32
    %v1336 = vpop.permute.xlu0 %1335
    %v1339 = vsel %vm198, %v1279, %v1334
    %v1340 = vsel %vm198, %v1280, %v1336
    %1341 = vmatprep.subr.mxu0 0.0
    %1342 = vmatpush1.msra.mxu0 %v1339
    %1343 = vmatprep.subr.mxu0 0.0
    %1344 = vmatpush1.msra.mxu0 %v1340
    %1345 = vmatprep.subr.mxu0 0.0
    %1346 = vmatpush1.msra.mxu0 0.0
    %1347 = vmatprep.subr.mxu0 0.0
    %1348 = vmatpush1.msra.mxu0 0.0
    %1349 = vmatprep.subr.mxu0 0.0
    %1350 = vmatpush1.msra.mxu0 0.0
    %1351 = vmatprep.subr.mxu0 0.0
    %1352 = vmatpush1.msra.mxu0 0.0
    %1353 = vmatprep.subr.mxu0 0.0
    %1354 = vmatpush1.msra.mxu0 0.0
    %1355 = vmatprep.subr.mxu0 0.0
    %1356 = vmatpush1.msra.mxu0 0.0
    %1357 = vmatprep.subr.mxu0 0.0
    %1358 = vmatpush1.msra.mxu0 0.0
    %1359 = vmatprep.subr.mxu0 0.0
    %1360 = vmatpush1.msra.mxu0 0.0
    %1361 = vmatprep.subr.mxu0 0.0
    %1362 = vmatpush1.msra.mxu0 0.0
    %1363 = vmatprep.subr.mxu0 0.0
    %1364 = vmatpush1.msra.mxu0 0.0
    %1365 = vmatprep.subr.mxu0 0.0
    %1366 = vmatpush1.msra.mxu0 0.0
    %1367 = vmatprep.subr.mxu0 0.0
    %1368 = vmatpush1.msra.mxu0 0.0
    %1369 = vmatprep.subr.mxu0 0.0
    %1370 = vmatpush1.msra.mxu0 0.0
    %1371 = vmatprep.subr.mxu0 0.0
    %1372 = vmatpush1.msra.mxu0 0.0
    %1373 = vmatprep.subr.mxu0 0.0
    %1374 = vmatpush1.msra.mxu0 0.0
    %1375 = vmatprep.subr.mxu0 0.0
    %1376 = vmatpush1.msra.mxu0 0.0
    %1377 = vmatprep.subr.mxu0 0.0
    %1378 = vmatpush1.msra.mxu0 0.0
    %1379 = vmatprep.subr.mxu0 0.0
    %1380 = vmatpush1.msra.mxu0 0.0
    %1381 = vmatprep.subr.mxu0 0.0
    %1382 = vmatpush1.msra.mxu0 0.0
    %1383 = vmatprep.subr.mxu0 0.0
    %1384 = vmatpush1.msra.mxu0 0.0
    %1385 = vmatprep.subr.mxu0 0.0
    %1386 = vmatpush1.msra.mxu0 0.0
    %1387 = vmatprep.subr.mxu0 0.0
    %1388 = vmatpush1.msra.mxu0 0.0
    %1389 = vmatprep.subr.mxu0 0.0
    %1390 = vmatpush1.msra.mxu0 0.0
    %1391 = vmatprep.subr.mxu0 0.0
    %1392 = vmatpush1.msra.mxu0 0.0
    %1393 = vmatprep.subr.mxu0 0.0
    %1394 = vmatpush1.msra.mxu0 0.0
    %1395 = vmatprep.subr.mxu0 0.0
    %1396 = vmatpush1.msra.mxu0 0.0
    %1397 = vmatprep.subr.mxu0 0.0
    %1398 = vmatpush1.msra.mxu0 0.0
    %1399 = vmatprep.subr.mxu0 0.0
    %1400 = vmatpush1.msra.mxu0 0.0
    %1401 = vmatprep.subr.mxu0 0.0
    %1402 = vmatpush1.msra.mxu0 0.0
    %1403 = vmatprep.subr.mxu0 0.0
    %1404 = vmatpush1.msra.mxu0 0.0
    %1405 = vmatprep.mubr.f32.mxu0 0.0
    %1406 = vmatmul.mubr.f32.gmra.mrb[0].mxu0 %v512
    %v1407 = vpop.f32.mrb[0].mxu0
    %v1408 = vadd.f32 0.0, %v1407
    %v1409 = vpop.f32.mrb[0].mxu0
    %1410 = vdwg.mxu0
    %v1411 = vadd.f32 %v924, %v1408
    %v1412 = vadd.f32 %v930, %v1408
    %s1413 = scalar_lea.vmem %s12, 192
    %v1414 = vld [vmem:[%s1413] sm:$0xff]
    %v1415 = vld [vmem:[%s1413 + $0x8] sm:$0xff]
    %v1416 = vld [vmem:[%s1413 + $0x10] sm:$0xff]
    %v1417 = vld [vmem:[%s1413 + $0x18] sm:$0xff]
    %v1418 = vld [vmem:[%s1413 + $0x20] sm:$0xff]
    %v1419 = vld [vmem:[%s1413 + $0x28] sm:$0xff]
    %v1420 = vld [vmem:[%s1413 + $0x30] sm:$0xff]
    %v1421 = vld [vmem:[%s1413 + $0x38] sm:$0xff]
    %v1422 = vld [vmem:[%s1413 + $0x40] sm:$0xff]
    %v1423 = vld [vmem:[%s1413 + $0x48] sm:$0xff]
    %v1424 = vld [vmem:[%s1413 + $0x50] sm:$0xff]
    %v1425 = vld [vmem:[%s1413 + $0x58] sm:$0xff]
    %v1426 = vld [vmem:[%s1413 + $0x60] sm:$0xff]
    %v1427 = vld [vmem:[%s1413 + $0x68] sm:$0xff]
    %v1428 = vld [vmem:[%s1413 + $0x70] sm:$0xff]
    %v1429 = vld [vmem:[%s1413 + $0x78] sm:$0xff]
    %v1430 = vld [vmem:[%s1413 + $0x80] sm:$0xff]
    %v1431 = vld [vmem:[%s1413 + $0x88] sm:$0xff]
    %v1432 = vld [vmem:[%s1413 + $0x90] sm:$0xff]
    %v1433 = vld [vmem:[%s1413 + $0x98] sm:$0xff]
    %v1434 = vld [vmem:[%s1413 + $0xa0] sm:$0xff]
    %v1435 = vld [vmem:[%s1413 + $0xa8] sm:$0xff]
    %v1436 = vld [vmem:[%s1413 + $0xb0] sm:$0xff]
    %v1437 = vld [vmem:[%s1413 + $0xb8] sm:$0xff]
    %1439 = vrot.lane.b32.xlu0 %v1412, 96
    %v1440 = vpop.permute.xlu0 %1439
    %v1441 = vsel %vm362, %v1440, 0
    %1443 = vmatprep.subr.mxu0 %v1415
    %1444 = vmatpush1.msra.mxu0 %v1414
    %1445 = vmatprep.subr.mxu0 %v1417
    %1446 = vmatpush1.msra.mxu0 %v1416
    %1447 = vmatprep.subr.mxu0 %v1419
    %1448 = vmatpush1.msra.mxu0 %v1418
    %1449 = vmatprep.subr.mxu0 %v1421
    %1450 = vmatpush1.msra.mxu0 %v1420
    %1451 = vmatprep.subr.mxu0 %v1423
    %1452 = vmatpush1.msra.mxu0 %v1422
    %1453 = vmatprep.subr.mxu0 %v1425
    %1454 = vmatpush1.msra.mxu0 %v1424
    %1455 = vmatprep.subr.mxu0 %v1427
    %1456 = vmatpush1.msra.mxu0 %v1426
    %1457 = vmatprep.subr.mxu0 %v1429
    %1458 = vmatpush1.msra.mxu0 %v1428
    %1459 = vmatprep.subr.mxu0 %v1431
    %1460 = vmatpush1.msra.mxu0 %v1430
    %1461 = vmatprep.subr.mxu0 %v1433
    %1462 = vmatpush1.msra.mxu0 %v1432
    %1463 = vmatprep.subr.mxu0 %v1435
    %1464 = vmatpush1.msra.mxu0 %v1434
    %1465 = vmatprep.subr.mxu0 %v1437
    %1466 = vmatpush1.msra.mxu0 %v1436
    %1467 = vmatprep.subr.mxu0 0.0
    %1468 = vmatpush1.msra.mxu0 0.0
    %1469 = vmatprep.subr.mxu0 0.0
    %1470 = vmatpush1.msra.mxu0 0.0
    %1471 = vmatprep.subr.mxu0 0.0
    %1472 = vmatpush1.msra.mxu0 0.0
    %1473 = vmatprep.subr.mxu0 0.0
    %1474 = vmatpush1.msra.mxu0 0.0
    %1475 = vmatprep.subr.mxu0 0.0
    %1476 = vmatpush1.msra.mxu0 0.0
    %1477 = vmatprep.subr.mxu0 0.0
    %1478 = vmatpush1.msra.mxu0 0.0
    %1479 = vmatprep.subr.mxu0 0.0
    %1480 = vmatpush1.msra.mxu0 0.0
    %1481 = vmatprep.subr.mxu0 0.0
    %1482 = vmatpush1.msra.mxu0 0.0
    %1483 = vmatprep.subr.mxu0 0.0
    %1484 = vmatpush1.msra.mxu0 0.0
    %1485 = vmatprep.subr.mxu0 0.0
    %1486 = vmatpush1.msra.mxu0 0.0
    %1487 = vmatprep.subr.mxu0 0.0
    %1488 = vmatpush1.msra.mxu0 0.0
    %1489 = vmatprep.subr.mxu0 0.0
    %1490 = vmatpush1.msra.mxu0 0.0
    %1491 = vmatprep.subr.mxu0 0.0
    %1492 = vmatpush1.msra.mxu0 0.0
    %1493 = vmatprep.subr.mxu0 0.0
    %1494 = vmatpush1.msra.mxu0 0.0
    %1495 = vmatprep.subr.mxu0 0.0
    %1496 = vmatpush1.msra.mxu0 0.0
    %1497 = vmatprep.subr.mxu0 0.0
    %1498 = vmatpush1.msra.mxu0 0.0
    %1499 = vmatprep.subr.mxu0 0.0
    %1500 = vmatpush1.msra.mxu0 0.0
    %1501 = vmatprep.subr.mxu0 0.0
    %1502 = vmatpush1.msra.mxu0 0.0
    %1503 = vmatprep.subr.mxu0 0.0
    %1504 = vmatpush1.msra.mxu0 0.0
    %1505 = vmatprep.subr.mxu0 0.0
    %1506 = vmatpush1.msra.mxu0 0.0
    %1507 = vmatprep.mubr.f32.mxu0 0.0
    %1508 = vmatmul.mubr.f32.gmra.mrb[0].mxu0 %v1441
    %v1509 = vpop.f32.mrb[0].mxu0
    %v1510 = vadd.f32 0.0, %v1509
    %v1511 = vpop.f32.mrb[0].mxu0
    %v1512 = vadd.f32 0.0, %v1511
    %1513 = vdwg.mxu0
    %v1514 = vmul.f32 %v1510, %v1510
    %1516 = vrot.lane.b32.xlu0 %v1514, 96
    %v1517 = vpop.permute.xlu0 %1516
    %v1519 = vadd.f32 %v1514, %v1517
    %1520 = vrot.lane.b32.xlu0 %v1514, 64
    %v1521 = vpop.permute.xlu0 %1520
    %v1523 = vadd.f32 %v1519, %v1521
    %v1524 = vadd.f32 %v1523, 1e-08
    %v1525 = vrsqrt.pop %v1524
    %v1526 = vmul.f32 %v1524, %v1525
    %vm1527 = vcmp.eq.f32.partialorder %v1524, inf
    %v1528 = vsel %vm1527, %v1524, %v1526
    %vm1529 = vcmp.eq.f32.partialorder %v1524, 0.0
    %v1530 = vand.u32 %v1524, 2147483648
    %v1531 = vsel %vm1529, %v1530, %v1528
    %1534 = vrot.lane.b32.xlu0 %v1510, 32
    %v1535 = vpop.permute.xlu0 %1534
    %1536 = vrot.lane.b32.xlu0 %v1512, 32
    %v1537 = vpop.permute.xlu0 %1536
    %v1538 = vsel %vm198, %v1535, %v1537
    %v1540 = vmul.f32 %v1510, %v1538
    %1542 = vrot.lane.b32.xlu0 %v1540, 96
    %v1543 = vpop.permute.xlu0 %1542
    %v1545 = vadd.f32 %v1540, %v1543
    %1546 = vrot.lane.b32.xlu0 %v1540, 64
    %v1547 = vpop.permute.xlu0 %1546
    %v1549 = vadd.f32 %v1545, %v1547
    %1551 = vrot.lane.b32.xlu0 %v1531, 32
    %v1552 = vpop.permute.xlu0 %1551
    %v1554 = vsel %vm198, %v1411, %v1552
    %s1555 = scalar_lea.vmem %s13, 64
    %v1556 = vld [vmem:[%s1555] sm:$0xff]
    %v1557 = vld [vmem:[%s1555 + $0x8] sm:$0xff]
    %v1558 = vld [vmem:[%s1555 + $0x10] sm:$0xff]
    %v1559 = vld [vmem:[%s1555 + $0x18] sm:$0xff]
    %v1560 = vld [vmem:[%s1555 + $0x20] sm:$0xff]
    %v1561 = vld [vmem:[%s1555 + $0x28] sm:$0xff]
    %v1562 = vld [vmem:[%s1555 + $0x30] sm:$0xff]
    %v1563 = vld [vmem:[%s1555 + $0x38] sm:$0xff]
    %s1564 = scalar_lea.vmem %s14, 1
    %v1565 = vld [vmem:[%s1564] sm:$0x1]
    %v1567 = vlaneseq
    %v1568 = vshrl.u32 %v1567, 7
    %v1569 = vsub.s32 0, %v1568
    %v1570 = vrot.slane %v1565, %v1569
    %v1573 = vsel %vm466, %v1554, 0
    %1575 = vmatprep.subr.mxu0 0.0
    %1576 = vmatpush1.msra.mxu0 %v1556
    %1577 = vmatprep.subr.mxu0 0.0
    %1578 = vmatpush1.msra.mxu0 %v1557
    %1579 = vmatprep.subr.mxu0 0.0
    %1580 = vmatpush1.msra.mxu0 %v1558
    %1581 = vmatprep.subr.mxu0 0.0
    %1582 = vmatpush1.msra.mxu0 %v1559
    %1583 = vmatprep.subr.mxu0 0.0
    %1584 = vmatpush1.msra.mxu0 %v1560
    %1585 = vmatprep.subr.mxu0 0.0
    %1586 = vmatpush1.msra.mxu0 %v1561
    %1587 = vmatprep.subr.mxu0 0.0
    %1588 = vmatpush1.msra.mxu0 %v1562
    %1589 = vmatprep.subr.mxu0 0.0
    %1590 = vmatpush1.msra.mxu0 %v1563
    %1591 = vmatprep.subr.mxu0 0.0
    %1592 = vmatpush1.msra.mxu0 0.0
    %1593 = vmatprep.subr.mxu0 0.0
    %1594 = vmatpush1.msra.mxu0 0.0
    %1595 = vmatprep.subr.mxu0 0.0
    %1596 = vmatpush1.msra.mxu0 0.0
    %1597 = vmatprep.subr.mxu0 0.0
    %1598 = vmatpush1.msra.mxu0 0.0
    %1599 = vmatprep.subr.mxu0 0.0
    %1600 = vmatpush1.msra.mxu0 0.0
    %1601 = vmatprep.subr.mxu0 0.0
    %1602 = vmatpush1.msra.mxu0 0.0
    %1603 = vmatprep.subr.mxu0 0.0
    %1604 = vmatpush1.msra.mxu0 0.0
    %1605 = vmatprep.subr.mxu0 0.0
    %1606 = vmatpush1.msra.mxu0 0.0
    %1607 = vmatprep.subr.mxu0 0.0
    %1608 = vmatpush1.msra.mxu0 0.0
    %1609 = vmatprep.subr.mxu0 0.0
    %1610 = vmatpush1.msra.mxu0 0.0
    %1611 = vmatprep.subr.mxu0 0.0
    %1612 = vmatpush1.msra.mxu0 0.0
    %1613 = vmatprep.subr.mxu0 0.0
    %1614 = vmatpush1.msra.mxu0 0.0
    %1615 = vmatprep.subr.mxu0 0.0
    %1616 = vmatpush1.msra.mxu0 0.0
    %1617 = vmatprep.subr.mxu0 0.0
    %1618 = vmatpush1.msra.mxu0 0.0
    %1619 = vmatprep.subr.mxu0 0.0
    %1620 = vmatpush1.msra.mxu0 0.0
    %1621 = vmatprep.subr.mxu0 0.0
    %1622 = vmatpush1.msra.mxu0 0.0
    %1623 = vmatprep.subr.mxu0 0.0
    %1624 = vmatpush1.msra.mxu0 0.0
    %1625 = vmatprep.subr.mxu0 0.0
    %1626 = vmatpush1.msra.mxu0 0.0
    %1627 = vmatprep.subr.mxu0 0.0
    %1628 = vmatpush1.msra.mxu0 0.0
    %1629 = vmatprep.subr.mxu0 0.0
    %1630 = vmatpush1.msra.mxu0 0.0
    %1631 = vmatprep.subr.mxu0 0.0
    %1632 = vmatpush1.msra.mxu0 0.0
    %1633 = vmatprep.subr.mxu0 0.0
    %1634 = vmatpush1.msra.mxu0 0.0
    %1635 = vmatprep.subr.mxu0 0.0
    %1636 = vmatpush1.msra.mxu0 0.0
    %1637 = vmatprep.subr.mxu0 0.0
    %1638 = vmatpush1.msra.mxu0 0.0
    %1639 = vmatprep.mubr.f32.mxu0 0.0
    %1640 = vmatmul.mubr.f32.gmra.mrb[0].mxu0 %v1573
    %v1641 = vpop.f32.mrb[0].mxu0
    %v1642 = vadd.f32 %v1570, %v1641
    %v1643 = vpop.f32.mrb[0].mxu0
    %1644 = vdwg.mxu0
    %v1645 = vsub.f32 0.0, %v1642
    %v1646 = vmul.f32 %v1645, 1.442695
    %v1647 = vpow.pop %v1646
    %v1648 = vadd.f32 %v1647, 1.0
    %v1649 = vrcp.pop %v1648
    %v1650 = vmul.f32 %v1642, %v1649
    %s1651 = scalar_lea.vmem %s15, 32
    %v1652 = vld [vmem:[%s1651] sm:$0xff]
    %v1653 = vld [vmem:[%s1651 + $0x8] sm:$0xff]
    %v1654 = vld [vmem:[%s1651 + $0x10] sm:$0xff]
    %v1655 = vld [vmem:[%s1651 + $0x18] sm:$0xff]
    %s1656 = scalar_lea.vmem %s16, 1
    %v1657 = vld [vmem:[%s1656] sm:$0x1]
    %v1659 = vlaneseq
    %v1660 = vshrl.u32 %v1659, 7
    %v1661 = vsub.s32 0, %v1660
    %v1662 = vrot.slane %v1657, %v1661
    %v1665 = vsel %vm198, %v1650, 0
    %1667 = vmatprep.subr.mxu0 0.0
    %1668 = vmatpush1.msra.mxu0 %v1652
    %1669 = vmatprep.subr.mxu0 0.0
    %1670 = vmatpush1.msra.mxu0 %v1653
    %1671 = vmatprep.subr.mxu0 0.0
    %1672 = vmatpush1.msra.mxu0 %v1654
    %1673 = vmatprep.subr.mxu0 0.0
    %1674 = vmatpush1.msra.mxu0 %v1655
    %1675 = vmatprep.subr.mxu0 0.0
    %1676 = vmatpush1.msra.mxu0 0.0
    %1677 = vmatprep.subr.mxu0 0.0
    %1678 = vmatpush1.msra.mxu0 0.0
    %1679 = vmatprep.subr.mxu0 0.0
    %1680 = vmatpush1.msra.mxu0 0.0
    %1681 = vmatprep.subr.mxu0 0.0
    %1682 = vmatpush1.msra.mxu0 0.0
    %1683 = vmatprep.subr.mxu0 0.0
    %1684 = vmatpush1.msra.mxu0 0.0
    %1685 = vmatprep.subr.mxu0 0.0
    %1686 = vmatpush1.msra.mxu0 0.0
    %1687 = vmatprep.subr.mxu0 0.0
    %1688 = vmatpush1.msra.mxu0 0.0
    %1689 = vmatprep.subr.mxu0 0.0
    %1690 = vmatpush1.msra.mxu0 0.0
    %1691 = vmatprep.subr.mxu0 0.0
    %1692 = vmatpush1.msra.mxu0 0.0
    %1693 = vmatprep.subr.mxu0 0.0
    %1694 = vmatpush1.msra.mxu0 0.0
    %1695 = vmatprep.subr.mxu0 0.0
    %1696 = vmatpush1.msra.mxu0 0.0
    %1697 = vmatprep.subr.mxu0 0.0
    %1698 = vmatpush1.msra.mxu0 0.0
    %1699 = vmatprep.subr.mxu0 0.0
    %1700 = vmatpush1.msra.mxu0 0.0
    %1701 = vmatprep.subr.mxu0 0.0
    %1702 = vmatpush1.msra.mxu0 0.0
    %1703 = vmatprep.subr.mxu0 0.0
    %1704 = vmatpush1.msra.mxu0 0.0
    %1705 = vmatprep.subr.mxu0 0.0
    %1706 = vmatpush1.msra.mxu0 0.0
    %1707 = vmatprep.subr.mxu0 0.0
    %1708 = vmatpush1.msra.mxu0 0.0
    %1709 = vmatprep.subr.mxu0 0.0
    %1710 = vmatpush1.msra.mxu0 0.0
    %1711 = vmatprep.subr.mxu0 0.0
    %1712 = vmatpush1.msra.mxu0 0.0
    %1713 = vmatprep.subr.mxu0 0.0
    %1714 = vmatpush1.msra.mxu0 0.0
    %1715 = vmatprep.subr.mxu0 0.0
    %1716 = vmatpush1.msra.mxu0 0.0
    %1717 = vmatprep.subr.mxu0 0.0
    %1718 = vmatpush1.msra.mxu0 0.0
    %1719 = vmatprep.subr.mxu0 0.0
    %1720 = vmatpush1.msra.mxu0 0.0
    %1721 = vmatprep.subr.mxu0 0.0
    %1722 = vmatpush1.msra.mxu0 0.0
    %1723 = vmatprep.subr.mxu0 0.0
    %1724 = vmatpush1.msra.mxu0 0.0
    %1725 = vmatprep.subr.mxu0 0.0
    %1726 = vmatpush1.msra.mxu0 0.0
    %1727 = vmatprep.subr.mxu0 0.0
    %1728 = vmatpush1.msra.mxu0 0.0
    %1729 = vmatprep.subr.mxu0 0.0
    %1730 = vmatpush1.msra.mxu0 0.0
    %1731 = vmatprep.mubr.f32.mxu0 0.0
    %1732 = vmatmul.mubr.f32.gmra.mrb[0].mxu0 %v1665
    %v1733 = vpop.f32.mrb[0].mxu0
    %v1734 = vadd.f32 %v1662, %v1733
    %v1735 = vpop.f32.mrb[0].mxu0
    %1736 = vdwg.mxu0
    %1738 = vrot.lane.b32.xlu0 %v1734, 96
    %v1739 = vpop.permute.xlu0 %1738
    %1741 = vrot.lane.b32.xlu0 %v1734, 32
    %v1742 = vpop.permute.xlu0 %1741
    %v1744 = vsel %vm198, %v1739, %v1734
    %v1745 = vsel %vm466, %v1744, %v1742
    %v1746 = vadd.f32 %v1411, %v1734
    %1748 = vrot.lane.b32.xlu0 %v1549, 64
    %v1749 = vpop.permute.xlu0 %1748
    %v1751 = vmul.f32 %v1734, %v1749
    %1753 = vrot.lane.b32.xlu0 %v1751, 64
    %v1754 = vpop.permute.xlu0 %1753
    %v1756 = vadd.f32 %v1746, %v1754
    %v1757 = vmul.f32 %v1745, %v1538
    %1759 = vrot.lane.b32.xlu0 %v1757, 32
    %v1760 = vpop.permute.xlu0 %1759
    %v1762 = vadd.f32 %v1412, %v1760
    %1763 = vst.msk [vmem:[#allocation3] sm:$0xff] %vm198, %v1756
    %1765 = vrot.lane.b32.xlu0 %v1762, 96
    %v1766 = vpop.permute.xlu0 %1765
    %1768 = vst.msk [vmem:[%s22] sm:$0xff] %vm362, %v1766
    %v1769 = vld [vmem:[%s17] sm:$0xff]
    %v1770 = vld [vmem:[%s17 + $0x8] sm:$0xff]
    %v1771 = vld [vmem:[%s17 + $0x10] sm:$0xff]
    %v1772 = vld [vmem:[%s17 + $0x18] sm:$0xff]
    %v1773 = vld [vmem:[%s18] sm:$0x1]
    %v1775 = vlaneseq
    %v1776 = vshrl.u32 %v1775, 7
    %v1777 = vsub.s32 0, %v1776
    %v1778 = vrot.slane %v1773, %v1777
    %v1781 = vsel %vm198, %v1756, 0
    %1783 = vmatprep.subr.mxu0 0.0
    %1784 = vmatpush1.msra.mxu0 %v1769
    %1785 = vmatprep.subr.mxu0 0.0
    %1786 = vmatpush1.msra.mxu0 %v1770
    %1787 = vmatprep.subr.mxu0 0.0
    %1788 = vmatpush1.msra.mxu0 %v1771
    %1789 = vmatprep.subr.mxu0 0.0
    %1790 = vmatpush1.msra.mxu0 %v1772
    %1791 = vmatprep.subr.mxu0 0.0
    %1792 = vmatpush1.msra.mxu0 0.0
    %1793 = vmatprep.subr.mxu0 0.0
    %1794 = vmatpush1.msra.mxu0 0.0
    %1795 = vmatprep.subr.mxu0 0.0
    %1796 = vmatpush1.msra.mxu0 0.0
    %1797 = vmatprep.subr.mxu0 0.0
    %1798 = vmatpush1.msra.mxu0 0.0
    %1799 = vmatprep.subr.mxu0 0.0
    %1800 = vmatpush1.msra.mxu0 0.0
    %1801 = vmatprep.subr.mxu0 0.0
    %1802 = vmatpush1.msra.mxu0 0.0
    %1803 = vmatprep.subr.mxu0 0.0
    %1804 = vmatpush1.msra.mxu0 0.0
    %1805 = vmatprep.subr.mxu0 0.0
    %1806 = vmatpush1.msra.mxu0 0.0
    %1807 = vmatprep.subr.mxu0 0.0
    %1808 = vmatpush1.msra.mxu0 0.0
    %1809 = vmatprep.subr.mxu0 0.0
    %1810 = vmatpush1.msra.mxu0 0.0
    %1811 = vmatprep.subr.mxu0 0.0
    %1812 = vmatpush1.msra.mxu0 0.0
    %1813 = vmatprep.subr.mxu0 0.0
    %1814 = vmatpush1.msra.mxu0 0.0
    %1815 = vmatprep.subr.mxu0 0.0
    %1816 = vmatpush1.msra.mxu0 0.0
    %1817 = vmatprep.subr.mxu0 0.0
    %1818 = vmatpush1.msra.mxu0 0.0
    %1819 = vmatprep.subr.mxu0 0.0
    %1820 = vmatpush1.msra.mxu0 0.0
    %1821 = vmatprep.subr.mxu0 0.0
    %1822 = vmatpush1.msra.mxu0 0.0
    %1823 = vmatprep.subr.mxu0 0.0
    %1824 = vmatpush1.msra.mxu0 0.0
    %1825 = vmatprep.subr.mxu0 0.0
    %1826 = vmatpush1.msra.mxu0 0.0
    %1827 = vmatprep.subr.mxu0 0.0
    %1828 = vmatpush1.msra.mxu0 0.0
    %1829 = vmatprep.subr.mxu0 0.0
    %1830 = vmatpush1.msra.mxu0 0.0
    %1831 = vmatprep.subr.mxu0 0.0
    %1832 = vmatpush1.msra.mxu0 0.0
    %1833 = vmatprep.subr.mxu0 0.0
    %1834 = vmatpush1.msra.mxu0 0.0
    %1835 = vmatprep.subr.mxu0 0.0
    %1836 = vmatpush1.msra.mxu0 0.0
    %1837 = vmatprep.subr.mxu0 0.0
    %1838 = vmatpush1.msra.mxu0 0.0
    %1839 = vmatprep.subr.mxu0 0.0
    %1840 = vmatpush1.msra.mxu0 0.0
    %1841 = vmatprep.subr.mxu0 0.0
    %1842 = vmatpush1.msra.mxu0 0.0
    %1843 = vmatprep.subr.mxu0 0.0
    %1844 = vmatpush1.msra.mxu0 0.0
    %1845 = vmatprep.subr.mxu0 0.0
    %1846 = vmatpush1.msra.mxu0 0.0
    %1847 = vmatprep.mubr.f32.mxu0 0.0
    %1848 = vmatmul.mubr.f32.gmra.mrb[0].mxu0 %v1781
    %v1849 = vpop.f32.mrb[0].mxu0
    %v1850 = vadd.f32 %v1778, %v1849
    %v1851 = vpop.f32.mrb[0].mxu0
    %1852 = vdwg.mxu0
    %v1853 = vsub.f32 0.0, %v1850
    %v1854 = vmul.f32 %v1853, 1.442695
    %v1855 = vpow.pop %v1854
    %v1856 = vadd.f32 %v1855, 1.0
    %v1857 = vrcp.pop %v1856
    %v1858 = vmul.f32 %v1850, %v1857
    %v1859 = vld [vmem:[%s19] sm:$0x1]
    %v1861 = vlaneseq
    %v1862 = vshrl.u32 %v1861, 7
    %v1863 = vsub.s32 0, %v1862
    %v1864 = vrot.slane %v1859, %v1863
    %v1866 = vmul.f32 %v1858, %v1864
    %v1867 = vsel %vm198, %v1866, 0.0
    %1868 = vadd.xlane.f32.xlu0 %v1867
    %v1869 = vpop.xlane.xlu0 %1868
    %v1870 = vld [vmem:[#allocation2] sm:$0x1]
    %v1872 = vlaneseq
    %v1873 = vshrl.u32 %v1872, 7
    %v1874 = vsub.s32 0, %v1873
    %v1875 = vrot.slane %v1870, %v1874
    %v1877 = vadd.f32 %v1869, %v1875
    %vm1878 = vcmask 7168
    %1879 = vst.msk [vmem:[%s23] sm:$0xff] %vm1878, %v1877
    // Predicated region
    $region86: #{painn_forward.1} parent=1 // pred_check
      _
    $region87: #{painn_forward.1} parent=1 // pred_check_branch
      %1881 = sbr.rel (0) target = $region89
    $region88: #{painn_forward.1} parent=1 // pred_region
      %s1883 = ssub.s32 128, 128
      %1884 = vsyncadd [#allocation4], %s1883
      %s1886 = sshll.u32 [#allocation3], 4
      %s1887 = int_to_ptr.vmem [resolvable:$true] %s1886
      %1889 = dma.vmem_to_hbm [thread:$0]  %s1887, 128, %s21, [#allocation4]
    $region89: #{painn_forward.1} parent=1 // pred_fallthru
      _
    // Predicated region
    $region90: #{painn_forward.1} parent=1 // pred_check
      _
    $region91: #{painn_forward.1} parent=1 // pred_check_branch
      %1891 = sbr.rel (0) target = $region93
    $region92: #{painn_forward.1} parent=1 // pred_region
      _
    $region93: #{painn_forward.1} parent=1 // pred_fallthru
      _
    // Predicated region
    $region94: #{painn_forward.1} parent=1 // pred_check
      _
    $region95: #{painn_forward.1} parent=1 // pred_check_branch
      %1893 = sbr.rel (0) target = $region97
    $region96: #{painn_forward.1} parent=1 // pred_region
      _
    $region97: #{painn_forward.1} parent=1 // pred_fallthru
      _
    // Predicated region
    $region98: #{painn_forward.1} parent=1 // pred_check
      _
    $region99: #{painn_forward.1} parent=1 // pred_check_branch
      %1895 = sbr.rel (0) target = $region101
    $region100: #{painn_forward.1} parent=1 // pred_region
      %1896 = dma.done [#allocation4], 128
    $region101: #{painn_forward.1} parent=1 // pred_fallthru
      _
    // Predicated region
    $region102: #{painn_forward.1} parent=1 // pred_check
      _
    $region103: #{painn_forward.1} parent=1 // pred_check_branch
      %1898 = sbr.rel (0) target = $region105
    $region104: #{painn_forward.1} parent=1 // pred_region
      _
    $region105: #{painn_forward.1} parent=1 // pred_fallthru
      _
    // Predicated region
    $region106: #{painn_forward.1} parent=1 // pred_check
      _
    $region107: #{painn_forward.1} parent=1 // pred_check_branch
      %1900 = sbr.rel (0) target = $region109
    $region108: #{painn_forward.1} parent=1 // pred_region
      _
    $region109: #{painn_forward.1} parent=1 // pred_fallthru
      _
    %1901 = vsyncpa [#allocation4], 1

</llo_original>
